<compile_context>
chip_gen: v7x
topology: tpu7x:2x2x1
jax: 0.10.0
libtpu: 0.0.40
codegen_flags: <defaults>
</compile_context>

<pallas_src>
import numpy as np
import jax
import jax.numpy as jnp
from jax.experimental import pallas as pl
from jax.experimental.pallas import tpu as pltpu


# ----------------------------------------------------------------------------
# CVFM Pallas kernel (the hot path of HybridEncoder's forward hooks)
# ----------------------------------------------------------------------------
def _erf_poly(x):
    # Abramowitz & Stegun 7.1.26 (|err| < 1.5e-7). Uses only exp/abs/where -> lowers on Mosaic.
    a1, a2, a3, a4, a5, p = (0.254829592, -0.284496736, 1.421413741,
                             -1.453152027, 1.061405429, 0.3275911)
    ax = jnp.abs(x)
    t = 1.0 / (1.0 + p * ax)
    poly = ((((a5 * t + a4) * t + a3) * t + a2) * t + a1) * t
    y = 1.0 - poly * jnp.exp(-ax * ax)
    return jnp.where(x >= 0, y, -y)


def _cvfm_kernel(vit_ref, conv_ref, interp_ref, w1v_ref, w1c_ref, b1_ref,
                 w2_ref, b2_ref, gate_ref, gamma_ref, beta_ref, out_ref):
    vit = vit_ref[...]                                       # (Npad, Dv) f32, pad rows are zero

    # bilinear resize + CLS mean token + row padding folded into one bf16 matmul (f32 accum).
    aligned = jnp.dot(interp_ref[...], conv_ref[...],
                      preferred_element_type=jnp.float32)    # (Npad, Dc) f32

    # combined = cat([vit, aligned], -1) @ W1  ==  vit @ W1v + aligned @ W1c   (bf16 MXU, f32 acc)
    h = (jnp.dot(vit.astype(jnp.bfloat16), w1v_ref[...],
                 preferred_element_type=jnp.float32)
         + jnp.dot(aligned.astype(jnp.bfloat16), w1c_ref[...],
                   preferred_element_type=jnp.float32)
         + b1_ref[...])                                      # (Npad, H4) f32
    # exact (erf-based) GELU, matching nn.GELU() default -- kept f32 on VPU/EUP
    h = 0.5 * h * (1.0 + _erf_poly(h * 0.7071067811865476))
    y = jnp.dot(h.astype(jnp.bfloat16), w2_ref[...],
                preferred_element_type=jnp.float32) + b2_ref[...]   # (Npad, Dv) f32

    g = jnp.tanh(gate_ref[...])                              # (1,1) -> broadcast
    z = vit + g * y

    # LayerNorm(vit_dim), eps = 1e-5 (PyTorch default), f32
    mu = jnp.mean(z, axis=-1, keepdims=True)
    var = jnp.mean((z - mu) ** 2, axis=-1, keepdims=True)
    out_ref[...] = (z - mu) * jax.lax.rsqrt(var + 1e-5) * gamma_ref[...] + beta_ref[...]


def cvfm_pallas(vit_tokens, conv_flat, interp_ext, p):
    """vit_tokens: (B, N, Dv) f32; conv_flat: (B, Hc*Wc, Dc) f32;
    interp_ext: (Npad, Hc*Wc) bf16 extended bilinear matrix (CLS-mean row + zero pad rows)."""
    B, N, Dv = vit_tokens.shape
    Npad, HcWc = interp_ext.shape
    Dc = conv_flat.shape[2]
    H4 = p["w1v"].shape[1]

    # pad the token axis to a multiple of 8 (sublane alignment); pad rows are sliced off below.
    vit_pad = jnp.pad(vit_tokens, ((0, 0), (0, Npad - N), (0, 0)))
    conv_bf = conv_flat.astype(jnp.bfloat16)
    w1v = p["w1v"].astype(jnp.bfloat16)
    w1c = p["w1c"].astype(jnp.bfloat16)
    w2 = p["w2"].astype(jnp.bfloat16)

    # explicit VMEM budget: double-buffered per-batch tiles + resident weights + f32 intermediates
    per_step = (2 * Npad * Dv * 4            # vit block + out block (f32)
                + HcWc * Dc * 2              # conv block (bf16)
                + Npad * HcWc * 2            # extended interp matrix (bf16)
                + (Dv * H4 + Dc * H4 + H4 * Dv) * 2   # weights (bf16)
                + (H4 + 3 * Dv + 1) * 4      # biases / gamma / beta / gate (f32)
                + Npad * H4 * 4)             # GELU intermediate (f32)
    vmem_limit = int(min(max(3 * per_step, 4 << 20), 48 << 20))

    out = pl.pallas_call(
        _cvfm_kernel,
        out_shape=jax.ShapeDtypeStruct((B, Npad, Dv), jnp.float32),
        grid_spec=pltpu.PrefetchScalarGridSpec(
            num_scalar_prefetch=0,
            grid=(B,),
            in_specs=[
                pl.BlockSpec((None, Npad, Dv), lambda b: (b, 0, 0)),   # vit tokens (squeezed B)
                pl.BlockSpec((None, HcWc, Dc), lambda b: (b, 0, 0)),   # conv features (squeezed B)
                pl.BlockSpec((Npad, HcWc), lambda b: (0, 0)),          # extended bilinear matrix
                pl.BlockSpec((Dv, H4), lambda b: (0, 0)),              # W1 (vit part), bf16
                pl.BlockSpec((Dc, H4), lambda b: (0, 0)),              # W1 (conv part), bf16
                pl.BlockSpec((1, H4), lambda b: (0, 0)),               # b1
                pl.BlockSpec((H4, Dv), lambda b: (0, 0)),              # W2, bf16
                pl.BlockSpec((1, Dv), lambda b: (0, 0)),               # b2
                pl.BlockSpec((1, 1), lambda b: (0, 0)),                # gate
                pl.BlockSpec((1, Dv), lambda b: (0, 0)),               # LN gamma
                pl.BlockSpec((1, Dv), lambda b: (0, 0)),               # LN beta
            ],
            out_specs=pl.BlockSpec((None, Npad, Dv), lambda b: (b, 0, 0)),
        ),
        compiler_params=pltpu.CompilerParams(
            dimension_semantics=("parallel",),
            vmem_limit_bytes=vmem_limit),
    )(vit_pad, conv_bf, interp_ext, w1v, w1c, p["b1"], w2, p["b2"],
      p["gate"], p["gamma"], p["beta"])
    return out[:, :N]


# ----------------------------------------------------------------------------
# Pure-JAX f32 reference for the CVFM math (used only for correctness checking)
# ----------------------------------------------------------------------------
def cvfm_reference(vit, conv_flat, interp, p):
    sp = jnp.einsum("sk,bkc->bsc", interp, conv_flat)
    cls = sp.mean(axis=1, keepdims=True)
    aligned = jnp.concatenate([cls, sp], axis=1)
    h = vit @ p["w1v"] + aligned @ p["w1c"] + p["b1"]
    h = 0.5 * h * (1.0 + jax.scipy.special.erf(h / jnp.sqrt(2.0)))
    y = h @ p["w2"] + p["b2"]
    z = vit + jnp.tanh(p["gate"][0, 0]) * y
    mu = z.mean(-1, keepdims=True)
    var = ((z - mu) ** 2).mean(-1, keepdims=True)
    return (z - mu) / jnp.sqrt(var + 1e-5) * p["gamma"] + p["beta"]


# ----------------------------------------------------------------------------
# Bilinear (align_corners=False) interpolation expressed as a matrix
# ----------------------------------------------------------------------------
def _bilinear_1d(out_size, in_size):
    W = np.zeros((out_size, in_size), dtype=np.float32)
    if in_size == 1:
        W[:, 0] = 1.0
        return W
    scale = in_size / out_size
    for i in range(out_size):
        src = max((i + 0.5) * scale - 0.5, 0.0)
        i0 = min(int(np.floor(src)), in_size - 1)
        i1 = min(i0 + 1, in_size - 1)
        l1 = src - i0
        W[i, i0] += 1.0 - l1
        W[i, i1] += l1
    return W


def bilinear_matrix(out_hw, in_hw):
    Lh = _bilinear_1d(out_hw[0], in_hw[0])
    Lw = _bilinear_1d(out_hw[1], in_hw[1])
    M = np.einsum("ip,jq->ijpq", Lh, Lw).reshape(out_hw[0] * out_hw[1], in_hw[0] * in_hw[1])
    return M.astype(np.float32)


def extended_bilinear_matrix(out_hw, in_hw, n_pad):
    """(n_pad, Hc*Wc) matrix: row 0 = CLS mean weights, rows 1..HW = bilinear weights, rest 0.
    TODO(synk): bilinear has <=4 nonzeros/row; at huge conv stages a 4-tap gather would beat
    this dense matmul -- dense is fine at these sizes and keeps everything on the MXU."""
    M = bilinear_matrix(out_hw, in_hw)
    HW, K = M.shape
    ext = np.zeros((n_pad, K), np.float32)
    ext[0] = M.mean(axis=0)
    ext[1:1 + HW] = M
    return jnp.asarray(ext, jnp.bfloat16)


# ----------------------------------------------------------------------------
# Deterministic synthetic backbones (glue; real ones are frozen pretrained nets)
# ----------------------------------------------------------------------------
def synthetic_convnext_stages(images, params):
    # stand-in for ConvNeXt-Large stage outputs: avg-pool downsample + 1x1 channel projection
    feats = []
    B, C, H, W = images.shape
    for S, proj in zip(params["conv_sizes"], params["convnext_proj"]):
        kh, kw = H // S, W // S
        pooled = images.reshape(B, C, S, kh, S, kw).mean(axis=(3, 5))      # [B, 3, S, S]
        feats.append(jnp.einsum("bchw,cd->bdhw", pooled, proj))            # [B, Ci, S, S]
    return feats


def synthetic_patch_embed(images, params):
    B, C, H, W = images.shape
    P = params["patch"]
    x = images.reshape(B, C, H // P, P, W // P, P).transpose(0, 2, 4, 1, 3, 5)
    x = x.reshape(B, (H // P) * (W // P), C * P * P)
    tok = x @ params["patch_w"]
    cls = jnp.broadcast_to(params["cls_tok"], (B, 1, tok.shape[-1]))
    return jnp.concatenate([cls, tok], axis=1)                             # [B, 1+hw, Dv]


def synthetic_vit_layer(x, w):
    return x + 0.1 * jnp.tanh(x @ w)


# ----------------------------------------------------------------------------
# HybridEncoder forward: convnext stages -> ViT layers with CVFM fusion hooks
# ----------------------------------------------------------------------------
def hybrid_encoder_forward(images_vit, images_convnext, params, use_pallas=True):
    conv_feats = synthetic_convnext_stages(images_convnext, params)
    x = synthetic_patch_embed(images_vit, params)
    # register_forward_hook(layers[idx-1]) -> fuse after layer (idx-1), 0-indexed
    hook_map = {idx - 1: i for i, idx in enumerate(params["interaction_idx"])}
    for layer_i, wl in enumerate(params["vit_layers"]):
        x = synthetic_vit_layer(x, wl)
        if layer_i in hook_map:
            i = hook_map[layer_i]
            f = conv_feats[i]                                              # [B, Cc, Hc, Wc]
            B, Cc, Hc, Wc = f.shape
            conv_flat = f.transpose(0, 2, 3, 1).reshape(B, Hc * Wc, Cc)    # row-major HW flatten
            if use_pallas:
                x = cvfm_pallas(x, conv_flat, params["interp_ext"][i], params["cvfm"][i])
            else:
                x = cvfm_reference(x, conv_flat, params["interp_mats"][i], params["cvfm"][i])
    return x


def init_cvfm_params(key, vit_dim, conv_dim):
    k1, k2, k3, k4 = jax.random.split(key, 4)
    fan1, hid = vit_dim + conv_dim, vit_dim * 4
    b1lim, b2lim = 1.0 / np.sqrt(fan1), 1.0 / np.sqrt(hid)
    w1 = jax.random.uniform(k1, (fan1, hid), jnp.float32, -b1lim, b1lim)
    b1 = jax.random.uniform(k2, (1, hid), jnp.float32, -b1lim, b1lim)
    w2 = jax.random.uniform(k3, (hid, vit_dim), jnp.float32, -b2lim, b2lim)
    b2 = jax.random.uniform(k4, (1, vit_dim), jnp.float32, -b2lim, b2lim)
    # Module init is nn.Parameter(torch.zeros(1)); use a nonzero deterministic value so the
    # fused MLP path is actually exercised in this synthetic test.
    gate = jnp.full((1, 1), 0.5, jnp.float32)
    return dict(w1v=w1[:vit_dim], w1c=w1[vit_dim:], b1=b1, w2=w2, b2=b2, gate=gate,
                gamma=jnp.ones((1, vit_dim), jnp.float32),
                beta=jnp.zeros((1, vit_dim), jnp.float32))


if __name__ == "__main__":
    # Lane-friendly scaled-down stand-in for ViT-L (1024) / ConvNeXt-L dims [192,384,768,1536]:
    # Dv = 128 (multiple of 128), H4 = 512, conv dims multiples of 128.
    B, Dv, patch, vit_img = 2, 128, 4, 16         # -> 4x4 patches, N = 17 tokens (padded to 24)
    conv_img = 64
    conv_dims = [128, 256, 384, 512]
    conv_sizes = [16, 8, 4, 2]                    # convnext stage spatial sizes (/4,/8,/16,/32)
    interaction_idx = [2, 6, 12, 20]
    n_layers = 24
    h = w = vit_img // patch
    N = 1 + h * w
    Npad = ((N + 7) // 8) * 8

    key = jax.random.PRNGKey(0)
    keys = iter(jax.random.split(key, 64))

    params = {
        "patch": patch,
        "interaction_idx": interaction_idx,
        "conv_sizes": conv_sizes,
        "patch_w": 0.05 * jax.random.normal(next(keys), (3 * patch * patch, Dv), jnp.float32),
        "cls_tok": 0.05 * jax.random.normal(next(keys), (1, 1, Dv), jnp.float32),
        "vit_layers": [0.1 * jax.random.normal(next(keys), (Dv, Dv), jnp.float32)
                       for _ in range(n_layers)],
        "convnext_proj": [jax.random.normal(next(keys), (3, c), jnp.float32) for c in conv_dims],
        "cvfm": [init_cvfm_params(next(keys), Dv, c) for c in conv_dims],
        "interp_mats": [jnp.asarray(bilinear_matrix((h, w), (s, s))) for s in conv_sizes],
        "interp_ext": [extended_bilinear_matrix((h, w), (s, s), Npad) for s in conv_sizes],
    }

    images_vit = jax.random.normal(next(keys), (B, 3, vit_img, vit_img), jnp.float32)
    images_convnext = jax.random.normal(next(keys), (B, 3, conv_img, conv_img), jnp.float32)

    out = hybrid_encoder_forward(images_vit, images_convnext, params, use_pallas=True)
    out = jax.block_until_ready(out)

    ref = hybrid_encoder_forward(images_vit, images_convnext, params, use_pallas=False)
    # tolerance accounts for bf16 MXU feeding (f32 accumulation) across 4 chained fusion stages;
    # a genuine kernel bug produces O(0.3+) errors on the LayerNorm'd output.
    np.testing.assert_allclose(np.asarray(out), np.asarray(ref), rtol=2e-2, atol=2e-2)

    print("KERNEL_OK")
</pallas_src>

<mosaic_0001>
module attributes {stable_mosaic.version = 11 : i64} {
  func.func @_cvfm_kernel(%arg0: i32, %arg1: memref<1x24x128xf32, #tpu.memory_space<vmem>>, %arg2: memref<1x256x128xbf16, #tpu.memory_space<vmem>>, %arg3: memref<24x256xbf16, #tpu.memory_space<vmem>>, %arg4: memref<128x512xbf16, #tpu.memory_space<vmem>>, %arg5: memref<128x512xbf16, #tpu.memory_space<vmem>>, %arg6: memref<1x512xf32, #tpu.memory_space<vmem>>, %arg7: memref<512x128xbf16, #tpu.memory_space<vmem>>, %arg8: memref<1x128xf32, #tpu.memory_space<vmem>>, %arg9: memref<1x1xf32, #tpu.memory_space<vmem>>, %arg10: memref<1x128xf32, #tpu.memory_space<vmem>>, %arg11: memref<1x128xf32, #tpu.memory_space<vmem>>, %arg12: memref<1x24x128xf32, #tpu.memory_space<vmem>>) attributes {dimension_semantics = [#tpu.dimension_semantics<parallel>], iteration_bounds = array<i64: 2>, scalar_prefetch = 0 : i64, scratch_operands = 0 : i64, tpu.core_type = #tpu.core_type<tc>, window_params = [{transform_indices = @transform_0, window_bounds = array<i64: 1, 24, 128>}, {transform_indices = @transform_1, window_bounds = array<i64: 1, 256, 128>}, {pipeline_mode = #tpu.pipeline_mode<synchronous>, transform_indices = @transform_2, window_bounds = array<i64: 24, 256>}, {pipeline_mode = #tpu.pipeline_mode<synchronous>, transform_indices = @transform_3, window_bounds = array<i64: 128, 512>}, {pipeline_mode = #tpu.pipeline_mode<synchronous>, transform_indices = @transform_4, window_bounds = array<i64: 128, 512>}, {pipeline_mode = #tpu.pipeline_mode<synchronous>, transform_indices = @transform_5, window_bounds = array<i64: 1, 512>}, {pipeline_mode = #tpu.pipeline_mode<synchronous>, transform_indices = @transform_6, window_bounds = array<i64: 512, 128>}, {pipeline_mode = #tpu.pipeline_mode<synchronous>, transform_indices = @transform_7, window_bounds = array<i64: 1, 128>}, {pipeline_mode = #tpu.pipeline_mode<synchronous>, transform_indices = @transform_8, window_bounds = array<i64: 1, 1>}, {pipeline_mode = #tpu.pipeline_mode<synchronous>, transform_indices = @transform_9, window_bounds = array<i64: 1, 128>}, {pipeline_mode = #tpu.pipeline_mode<synchronous>, transform_indices = @transform_10, window_bounds = array<i64: 1, 128>}, {transform_indices = @transform_11, window_bounds = array<i64: 1, 24, 128>}]} {
    %c0 = arith.constant 0 : index
    %c0_0 = arith.constant 0 : index
    %c0_1 = arith.constant 0 : index
    %0 = vector.load %arg1[%c0, %c0_0, %c0_1] : memref<1x24x128xf32, #tpu.memory_space<vmem>>, vector<1x24x128xf32>
    %1 = vector.shape_cast %0 : vector<1x24x128xf32> to vector<24x128xf32>
    %c0_2 = arith.constant 0 : index
    %c0_3 = arith.constant 0 : index
    %2 = vector.load %arg3[%c0_2, %c0_3] : memref<24x256xbf16, #tpu.memory_space<vmem>>, vector<24x256xbf16>
    %c0_4 = arith.constant 0 : index
    %c0_5 = arith.constant 0 : index
    %c0_6 = arith.constant 0 : index
    %3 = vector.load %arg2[%c0_4, %c0_5, %c0_6] : memref<1x256x128xbf16, #tpu.memory_space<vmem>>, vector<1x256x128xbf16>
    %4 = vector.shape_cast %3 : vector<1x256x128xbf16> to vector<256x128xbf16>
    %cst = arith.constant dense<0.000000e+00> : vector<24x128xf32>
    %5 = tpu.matmul %2, %4, %cst {dimension_numbers = #tpu.dot_dimension_numbers<[1], [0], [0], [1], [0, 0, 1, 1], [], []>} : vector<24x256xbf16>, vector<256x128xbf16>, vector<24x128xf32> -> vector<24x128xf32>
    %6 = arith.truncf %1 : vector<24x128xf32> to vector<24x128xbf16>
    %c0_7 = arith.constant 0 : index
    %c0_8 = arith.constant 0 : index
    %7 = vector.load %arg4[%c0_7, %c0_8] : memref<128x512xbf16, #tpu.memory_space<vmem>>, vector<128x512xbf16>
    %cst_9 = arith.constant dense<0.000000e+00> : vector<24x512xf32>
    %8 = tpu.matmul %6, %7, %cst_9 {dimension_numbers = #tpu.dot_dimension_numbers<[1], [0], [0], [1], [0, 0, 1, 1], [], []>} : vector<24x128xbf16>, vector<128x512xbf16>, vector<24x512xf32> -> vector<24x512xf32>
    %9 = arith.truncf %5 : vector<24x128xf32> to vector<24x128xbf16>
    %c0_10 = arith.constant 0 : index
    %c0_11 = arith.constant 0 : index
    %10 = vector.load %arg5[%c0_10, %c0_11] : memref<128x512xbf16, #tpu.memory_space<vmem>>, vector<128x512xbf16>
    %cst_12 = arith.constant dense<0.000000e+00> : vector<24x512xf32>
    %11 = tpu.matmul %9, %10, %cst_12 {dimension_numbers = #tpu.dot_dimension_numbers<[1], [0], [0], [1], [0, 0, 1, 1], [], []>} : vector<24x128xbf16>, vector<128x512xbf16>, vector<24x512xf32> -> vector<24x512xf32>
    %12 = arith.addf %8, %11 : vector<24x512xf32>
    %c0_13 = arith.constant 0 : index
    %c0_14 = arith.constant 0 : index
    %13 = vector.load %arg6[%c0_13, %c0_14] : memref<1x512xf32, #tpu.memory_space<vmem>>, vector<1x512xf32>
    %14 = vector.broadcast %13 : vector<1x512xf32> to vector<24x512xf32>
    %15 = arith.addf %12, %14 : vector<24x512xf32>
    %cst_15 = arith.constant 5.000000e-01 : f32
    %16 = vector.broadcast %cst_15 : f32 to vector<24x512xf32>
    %17 = arith.mulf %16, %15 : vector<24x512xf32>
    %cst_16 = arith.constant 0.707106769 : f32
    %18 = vector.broadcast %cst_16 : f32 to vector<24x512xf32>
    %19 = arith.mulf %15, %18 : vector<24x512xf32>
    %20 = math.absf %19 : vector<24x512xf32>
    %cst_17 = arith.constant 0.327591091 : f32
    %21 = vector.broadcast %cst_17 : f32 to vector<24x512xf32>
    %22 = arith.mulf %21, %20 : vector<24x512xf32>
    %cst_18 = arith.constant 1.000000e+00 : f32
    %23 = vector.broadcast %cst_18 : f32 to vector<24x512xf32>
    %24 = arith.addf %23, %22 : vector<24x512xf32>
    %cst_19 = arith.constant 1.000000e+00 : f32
    %25 = vector.broadcast %cst_19 : f32 to vector<24x512xf32>
    %26 = arith.divf %25, %24 : vector<24x512xf32>
    %cst_20 = arith.constant 1.06140542 : f32
    %27 = vector.broadcast %cst_20 : f32 to vector<24x512xf32>
    %28 = arith.mulf %27, %26 : vector<24x512xf32>
    %cst_21 = arith.constant -1.45315206 : f32
    %29 = vector.broadcast %cst_21 : f32 to vector<24x512xf32>
    %30 = arith.addf %28, %29 : vector<24x512xf32>
    %31 = arith.mulf %30, %26 : vector<24x512xf32>
    %cst_22 = arith.constant 1.42141378 : f32
    %32 = vector.broadcast %cst_22 : f32 to vector<24x512xf32>
    %33 = arith.addf %31, %32 : vector<24x512xf32>
    %34 = arith.mulf %33, %26 : vector<24x512xf32>
    %cst_23 = arith.constant -0.284496725 : f32
    %35 = vector.broadcast %cst_23 : f32 to vector<24x512xf32>
    %36 = arith.addf %34, %35 : vector<24x512xf32>
    %37 = arith.mulf %36, %26 : vector<24x512xf32>
    %cst_24 = arith.constant 0.254829586 : f32
    %38 = vector.broadcast %cst_24 : f32 to vector<24x512xf32>
    %39 = arith.addf %37, %38 : vector<24x512xf32>
    %40 = arith.mulf %39, %26 : vector<24x512xf32>
    %cst_25 = arith.constant 0.000000e+00 : f32
    %41 = vector.broadcast %cst_25 : f32 to vector<24x512xf32>
    %42 = arith.subf %41, %20 : vector<24x512xf32>
    %43 = arith.mulf %42, %20 : vector<24x512xf32>
    %44 = math.exp %43 : vector<24x512xf32>
    %45 = arith.mulf %40, %44 : vector<24x512xf32>
    %cst_26 = arith.constant 1.000000e+00 : f32
    %46 = vector.broadcast %cst_26 : f32 to vector<24x512xf32>
    %47 = arith.subf %46, %45 : vector<24x512xf32>
    %cst_27 = arith.constant 0.000000e+00 : f32
    %48 = vector.broadcast %cst_27 : f32 to vector<24x512xf32>
    %49 = arith.cmpf oge, %19, %48 : vector<24x512xf32>
    %cst_28 = arith.constant 0.000000e+00 : f32
    %50 = vector.broadcast %cst_28 : f32 to vector<24x512xf32>
    %51 = arith.subf %50, %47 : vector<24x512xf32>
    %52 = arith.select %49, %47, %51 : vector<24x512xi1>, vector<24x512xf32>
    %cst_29 = arith.constant 1.000000e+00 : f32
    %53 = vector.broadcast %cst_29 : f32 to vector<24x512xf32>
    %54 = arith.addf %53, %52 : vector<24x512xf32>
    %55 = arith.mulf %17, %54 : vector<24x512xf32>
    %56 = arith.truncf %55 : vector<24x512xf32> to vector<24x512xbf16>
    %c0_30 = arith.constant 0 : index
    %c0_31 = arith.constant 0 : index
    %57 = vector.load %arg7[%c0_30, %c0_31] : memref<512x128xbf16, #tpu.memory_space<vmem>>, vector<512x128xbf16>
    %cst_32 = arith.constant dense<0.000000e+00> : vector<24x128xf32>
    %58 = tpu.matmul %56, %57, %cst_32 {dimension_numbers = #tpu.dot_dimension_numbers<[1], [0], [0], [1], [0, 0, 1, 1], [], []>} : vector<24x512xbf16>, vector<512x128xbf16>, vector<24x128xf32> -> vector<24x128xf32>
    %c0_33 = arith.constant 0 : index
    %c0_34 = arith.constant 0 : index
    %59 = vector.load %arg8[%c0_33, %c0_34] : memref<1x128xf32, #tpu.memory_space<vmem>>, vector<1x128xf32>
    %60 = vector.broadcast %59 : vector<1x128xf32> to vector<24x128xf32>
    %61 = arith.addf %58, %60 : vector<24x128xf32>
    %c0_35 = arith.constant 0 : index
    %c0_36 = arith.constant 0 : index
    %62 = vector.load %arg9[%c0_35, %c0_36] : memref<1x1xf32, #tpu.memory_space<vmem>>, vector<1x1xf32>
    %63 = math.tanh %62 : vector<1x1xf32>
    %64 = vector.broadcast %63 : vector<1x1xf32> to vector<24x128xf32>
    %65 = arith.mulf %64, %61 : vector<24x128xf32>
    %66 = arith.addf %1, %65 : vector<24x128xf32>
    %cst_37 = arith.constant dense<0.000000e+00> : vector<24xf32>
    %67 = vector.multi_reduction <add>, %66, %cst_37 [1] : vector<24x128xf32> to vector<24xf32>
    %68 = vector.shape_cast %67 : vector<24xf32> to vector<24x1xf32>
    %cst_38 = arith.constant 1.280000e+02 : f32
    %69 = vector.broadcast %cst_38 : f32 to vector<24x1xf32>
    %70 = arith.divf %68, %69 : vector<24x1xf32>
    %71 = vector.broadcast %70 : vector<24x1xf32> to vector<24x128xf32>
    %72 = arith.subf %66, %71 : vector<24x128xf32>
    %73 = arith.mulf %72, %72 : vector<24x128xf32>
    %cst_39 = arith.constant dense<0.000000e+00> : vector<24xf32>
    %74 = vector.multi_reduction <add>, %73, %cst_39 [1] : vector<24x128xf32> to vector<24xf32>
    %75 = vector.shape_cast %74 : vector<24xf32> to vector<24x1xf32>
    %cst_40 = arith.constant 1.280000e+02 : f32
    %76 = vector.broadcast %cst_40 : f32 to vector<24x1xf32>
    %77 = arith.divf %75, %76 : vector<24x1xf32>
    %78 = vector.broadcast %70 : vector<24x1xf32> to vector<24x128xf32>
    %79 = arith.subf %66, %78 : vector<24x128xf32>
    %cst_41 = arith.constant 9.99999974E-6 : f32
    %80 = vector.broadcast %cst_41 : f32 to vector<24x1xf32>
    %81 = arith.addf %77, %80 : vector<24x1xf32>
    %82 = math.rsqrt %81 : vector<24x1xf32>
    %83 = vector.broadcast %82 : vector<24x1xf32> to vector<24x128xf32>
    %84 = arith.mulf %79, %83 : vector<24x128xf32>
    %c0_42 = arith.constant 0 : index
    %c0_43 = arith.constant 0 : index
    %85 = vector.load %arg10[%c0_42, %c0_43] : memref<1x128xf32, #tpu.memory_space<vmem>>, vector<1x128xf32>
    %86 = vector.broadcast %85 : vector<1x128xf32> to vector<24x128xf32>
    %87 = arith.mulf %84, %86 : vector<24x128xf32>
    %c0_44 = arith.constant 0 : index
    %c0_45 = arith.constant 0 : index
    %88 = vector.load %arg11[%c0_44, %c0_45] : memref<1x128xf32, #tpu.memory_space<vmem>>, vector<1x128xf32>
    %89 = vector.broadcast %88 : vector<1x128xf32> to vector<24x128xf32>
    %90 = arith.addf %87, %89 : vector<24x128xf32>
    %c0_46 = arith.constant 0 : index
    %c0_47 = arith.constant 0 : index
    %c0_48 = arith.constant 0 : index
    %91 = vector.load %arg12[%c0_46, %c0_47, %c0_48] : memref<1x24x128xf32, #tpu.memory_space<vmem>>, vector<1x24x128xf32>
    %92 = vector.shape_cast %91 : vector<1x24x128xf32> to vector<24x128xf32>
    %93 = vector.shape_cast %90 : vector<24x128xf32> to vector<1x24x128xf32>
    tpu.vector_store %arg12[%c0_46, %c0_47, %c0_48], %93 {strides = array<i32>} : memref<1x24x128xf32, #tpu.memory_space<vmem>>, vector<1x24x128xf32>,
    return
  }
  func.func @transform_0(%arg0: i32) -> (i32, i32, i32) {
    %c0_i32 = arith.constant 0 : i32
    %c0_i32_0 = arith.constant 0 : i32
    %c0_i32_1 = arith.constant 0 : i32
    return %arg0, %c0_i32, %c0_i32_0 : i32, i32, i32
  }
  func.func @transform_1(%arg0: i32) -> (i32, i32, i32) {
    %c0_i32 = arith.constant 0 : i32
    %c0_i32_0 = arith.constant 0 : i32
    %c0_i32_1 = arith.constant 0 : i32
    return %arg0, %c0_i32, %c0_i32_0 : i32, i32, i32
  }
  func.func @transform_2(%arg0: i32) -> (i32, i32) {
    %c0_i32 = arith.constant 0 : i32
    %c0_i32_0 = arith.constant 0 : i32
    %c0_i32_1 = arith.constant 0 : i32
    return %c0_i32, %c0_i32_0 : i32, i32
  }
  func.func @transform_3(%arg0: i32) -> (i32, i32) {
    %c0_i32 = arith.constant 0 : i32
    %c0_i32_0 = arith.constant 0 : i32
    %c0_i32_1 = arith.constant 0 : i32
    return %c0_i32, %c0_i32_0 : i32, i32
  }
  func.func @transform_4(%arg0: i32) -> (i32, i32) {
    %c0_i32 = arith.constant 0 : i32
    %c0_i32_0 = arith.constant 0 : i32
    %c0_i32_1 = arith.constant 0 : i32
    return %c0_i32, %c0_i32_0 : i32, i32
  }
  func.func @transform_5(%arg0: i32) -> (i32, i32) {
    %c0_i32 = arith.constant 0 : i32
    %c0_i32_0 = arith.constant 0 : i32
    %c0_i32_1 = arith.constant 0 : i32
    return %c0_i32, %c0_i32_0 : i32, i32
  }
  func.func @transform_6(%arg0: i32) -> (i32, i32) {
    %c0_i32 = arith.constant 0 : i32
    %c0_i32_0 = arith.constant 0 : i32
    %c0_i32_1 = arith.constant 0 : i32
    return %c0_i32, %c0_i32_0 : i32, i32
  }
  func.func @transform_7(%arg0: i32) -> (i32, i32) {
    %c0_i32 = arith.constant 0 : i32
    %c0_i32_0 = arith.constant 0 : i32
    %c0_i32_1 = arith.constant 0 : i32
    return %c0_i32, %c0_i32_0 : i32, i32
  }
  func.func @transform_8(%arg0: i32) -> (i32, i32) {
    %c0_i32 = arith.constant 0 : i32
    %c0_i32_0 = arith.constant 0 : i32
    %c0_i32_1 = arith.constant 0 : i32
    return %c0_i32, %c0_i32_0 : i32, i32
  }
  func.func @transform_9(%arg0: i32) -> (i32, i32) {
    %c0_i32 = arith.constant 0 : i32
    %c0_i32_0 = arith.constant 0 : i32
    %c0_i32_1 = arith.constant 0 : i32
    return %c0_i32, %c0_i32_0 : i32, i32
  }
  func.func @transform_10(%arg0: i32) -> (i32, i32) {
    %c0_i32 = arith.constant 0 : i32
    %c0_i32_0 = arith.constant 0 : i32
    %c0_i32_1 = arith.constant 0 : i32
    return %c0_i32, %c0_i32_0 : i32, i32
  }
  func.func @transform_11(%arg0: i32) -> (i32, i32, i32) {
    %c0_i32 = arith.constant 0 : i32
    %c0_i32_0 = arith.constant 0 : i32
    %c0_i32_1 = arith.constant 0 : i32
    return %arg0, %c0_i32, %c0_i32_0 : i32, i32, i32
  }
}

</mosaic_0001>

<llo_original>
// kernel: tpu_custom_call.1
$region0: #{tpu_custom_call.1}
  #allocation0 [shape = 'u32[]', space=smem, size = 0x4, offset = 0x4, fixed_abs, tag = 'smem constant byte address 0x4 - core index']
  #allocation1 [shape = 'u32[144,128]{1,0:T(1,128)}', space=vmem, size = 0x12000, scoped, tag = 'internal scratch']
  #allocation2 [shape = 'f32[1,1]{1,0:T(1,128)S(1)}', space=vmem, size = 0x200, scoped, tag = 'scoped memory for tpu_custom_call.1']
  %s0 = inlined_call_operand.hbm [shape: f32[2,24,128], index: 0, kind: input, shape index: {}]
  %s1 = inlined_call_operand.hbm [shape: bf16[2,256,128], index: 1, kind: input, shape index: {}]
  %s2 = inlined_call_operand.hbm [shape: bf16[24,256], index: 2, kind: input, shape index: {}]
  %s3 = inlined_call_operand.hbm [shape: bf16[128,512], index: 3, kind: input, shape index: {}]
  %s4 = inlined_call_operand.hbm [shape: bf16[128,512], index: 4, kind: input, shape index: {}]
  %s5 = inlined_call_operand.vmem [shape: f32[1,512], index: 5, kind: input, shape index: {}]
  %s6 = inlined_call_operand.hbm [shape: bf16[512,128], index: 6, kind: input, shape index: {}]
  %s7 = inlined_call_operand.vmem [shape: f32[1,128], index: 7, kind: input, shape index: {}]
  %s8 = inlined_call_operand.<no memory space> [shape: f32[1,1], index: 8, kind: input, shape index: {}]
  %s9 = inlined_call_operand.vmem [shape: f32[1,128], index: 9, kind: input, shape index: {}]
  %s10 = inlined_call_operand.vmem [shape: f32[1,128], index: 10, kind: input, shape index: {}]
  %s11 = inlined_call_operand.hbm [shape: f32[2,24,128], index: 11, kind: output, shape index: {}]
  %s12 = sld [smem:[#allocation0]]
  $region101: #{tpu_custom_call.1} parent=0
    _
  %s14 = ssub.s32 1, %s12
  %s15 = scalar_select 0, %s14, %s12
  %v16 = vstv %s8
  %17 = vst [vmem:[#allocation2] sm:$0x1] %v16
  $region1: #{tpu_custom_call.1} parent=0
    #allocation3 [shape = 'u8[24576]{0}', space=vmem, size = 0x6000, scoped, tag = 'input window, operand 0']
    #allocation4 [shape = 's32[2]{0}', space=sflag, size = 0x8, scoped, tag = 'scoped memory for tpu_custom_call.1']
    #allocation5 [shape = 's32[2]{0}', space=sflag, size = 0x8, scoped, tag = 'scoped memory for tpu_custom_call.1']
    #allocation6 [shape = 'u8[131072]{0}', space=vmem, size = 0x20000, scoped, tag = 'input window, operand 1']
    #allocation7 [shape = 's32[2]{0}', space=sflag, size = 0x8, scoped, tag = 'scoped memory for tpu_custom_call.1']
    #allocation8 [shape = 'u8[12288]{0}', space=vmem, size = 0x3000, scoped, tag = 'input window, operand 2, single buffered']
    #allocation9 [shape = 'u8[131072]{0}', space=vmem, size = 0x20000, scoped, tag = 'input window, operand 3, single buffered']
    #allocation10 [shape = 's32[1]{0}', space=sflag, size = 0x4, scoped, tag = 'scoped memory for tpu_custom_call.1']
    #allocation11 [shape = 'u8[131072]{0}', space=vmem, size = 0x20000, scoped, tag = 'input window, operand 4, single buffered']
    #allocation12 [shape = 'u8[131072]{0}', space=vmem, size = 0x20000, scoped, tag = 'input window, operand 6, single buffered']
    #allocation13 [shape = 's32[1]{0}', space=sflag, size = 0x4, scoped, tag = 'scoped memory for tpu_custom_call.1']
    #allocation14 [shape = 'u8[24576]{0}', space=vmem, size = 0x6000, scoped, tag = 'output window, operand 0']
    %18 = vsyncpa [#allocation4], 0
    %s19 = scalar_lea.sflag [#allocation4], 1
    %20 = vsyncpa %s19, 0
    %21 = vsyncpa [#allocation7], 0
    %s22 = scalar_lea.sflag [#allocation7], 1
    %23 = vsyncpa %s22, 0
    %24 = vsyncpa [#allocation10], 0
    %25 = vsyncpa [#allocation13], 0
    %26 = vsyncpa [#allocation5], 0
    %s27 = scalar_lea.sflag [#allocation5], 1
    %28 = vsyncpa %s27, 0
    loop: start=0, step=1, limit=4
    $region2: #{tpu_custom_call.1} parent=1 // loop_pre_header
      _
    $region3: #{tpu_custom_call.1} parent=1 // loop_header
      %s30 = sphi 0, %s34
      %p31 = scmp.ge.s32.totalorder %s30, 4
      %s40 = sphi 0, %s42
      %s43 = sphi 0, %s40
      %s44 = sphi 0, %s43
      %s60 = sphi 0, %s44
      %s66 = sphi 0, %s68
      %s69 = sphi 0, %s66
      %s70 = sphi 0, %s69
      %s86 = sphi 0, %s70
      %s90 = sphi 0, %s90
      %s92 = sphi 0, %s90
      %s93 = sphi 0, %s92
      %s107 = sphi 0, %s93
      %s111 = sphi 0, %s111
      %s113 = sphi 0, %s111
      %s114 = sphi 0, %s113
      %s128 = sphi 0, %s114
      %s132 = sphi 0, %s132
      %s134 = sphi 0, %s132
      %s135 = sphi 0, %s134
      %s149 = sphi 0, %s135
      %s153 = sphi 0, %s153
      %s155 = sphi 0, %s153
      %s156 = sphi 0, %s155
      %s170 = sphi 0, %s156
      %s174 = sphi 0, %s174
      %s176 = sphi 0, %s174
      %s177 = sphi 0, %s176
      %s191 = sphi 0, %s177
      %s195 = sphi 0, %s195
      %s197 = sphi 0, %s195
      %s198 = sphi 0, %s197
      %s212 = sphi 0, %s198
      %s216 = sphi 0, %s216
      %s218 = sphi 0, %s216
      %s219 = sphi 0, %s218
      %s233 = sphi 0, %s219
      %s237 = sphi 0, %s237
      %s239 = sphi 0, %s237
      %s240 = sphi 0, %s239
      %s254 = sphi 0, %s240
      %s258 = sphi 0, %s258
      %s260 = sphi 0, %s258
      %s261 = sphi 0, %s260
      %s275 = sphi 0, %s261
      %s281 = sphi 0, %s283
      %s284 = sphi 0, %s281
      %s285 = sphi 0, %s284
      %s301 = sphi 0, %s285
    $region4: #{tpu_custom_call.1} parent=1 // loop_header_branch
      %33 = sbr.rel (%p31) target = $region8
    $region5: #{tpu_custom_call.1} parent=1 // loop_body
      %s35 = ssub.s32 %s30, 1
      %s36 = ssub.s32 %s30, 2
      %s37 = sadd.s32 %s30, 1
      %s38 = ssub.s32 %s30, %s37
      %p39 = scmp.eq.s32.totalorder %s38, 0
      %s41 = sadd.s32 %s40, 1
      %s42 = scalar_select %p39, %s40, %s41
      %p45 = pneg %p39
      %p46 = scmp.eq.s32.totalorder %s30, 1
      %p47 = por %p45, %p46
      %p48 = scmp.ne.s32.totalorder %s40, %s43
      %p49 = scmp.eq.s32.totalorder %s30, 0
      %p50 = por %p48, %p49
      %p51 = scmp.ne.s32.totalorder %s40, %s43
      %p52 = scmp.eq.s32.totalorder %s35, 1
      %p53 = por %p51, %p52
      %p54 = scmp.ne.s32.totalorder %s43, %s44
      %p55 = scmp.eq.s32.totalorder %s35, 0
      %p56 = por %p54, %p55
      %p57 = scmp.ne.s32.totalorder %s43, %s44
      %p58 = scmp.eq.s32.totalorder %s36, 1
      %p59 = por %p57, %p58
      %p61 = scmp.ne.s32.totalorder %s44, %s60
      %p62 = scmp.eq.s32.totalorder %s36, 0
      %p63 = por %p61, %p62
      %s64 = ssub.s32 %s30, %s37
      %p65 = scmp.eq.s32.totalorder %s64, 0
      %s67 = sadd.s32 %s66, 1
      %s68 = scalar_select %p65, %s66, %s67
      %p71 = pneg %p65
      %p72 = scmp.eq.s32.totalorder %s30, 1
      %p73 = por %p71, %p72
      %p74 = scmp.ne.s32.totalorder %s66, %s69
      %p75 = scmp.eq.s32.totalorder %s30, 0
      %p76 = por %p74, %p75
      %p77 = scmp.ne.s32.totalorder %s66, %s69
      %p78 = scmp.eq.s32.totalorder %s35, 1
      %p79 = por %p77, %p78
      %p80 = scmp.ne.s32.totalorder %s69, %s70
      %p81 = scmp.eq.s32.totalorder %s35, 0
      %p82 = por %p80, %p81
      %p83 = scmp.ne.s32.totalorder %s69, %s70
      %p84 = scmp.eq.s32.totalorder %s36, 1
      %p85 = por %p83, %p84
      %p87 = scmp.ne.s32.totalorder %s70, %s86
      %p88 = scmp.eq.s32.totalorder %s36, 0
      %p89 = por %p87, %p88
      %s91 = sadd.s32 %s90, 1
      %p94 = scmp.eq.s32.totalorder %s30, 1
      %p95 = scmp.ne.s32.totalorder %s90, %s92
      %p96 = scmp.eq.s32.totalorder %s30, 0
      %p97 = por %p95, %p96
      %p98 = scmp.ne.s32.totalorder %s90, %s92
      %p99 = scmp.eq.s32.totalorder %s35, 1
      %p100 = por %p98, %p99
      %p101 = scmp.ne.s32.totalorder %s92, %s93
      %p102 = scmp.eq.s32.totalorder %s35, 0
      %p103 = por %p101, %p102
      %p104 = scmp.ne.s32.totalorder %s92, %s93
      %p105 = scmp.eq.s32.totalorder %s36, 1
      %p106 = por %p104, %p105
      %p108 = scmp.ne.s32.totalorder %s93, %s107
      %p109 = scmp.eq.s32.totalorder %s36, 0
      %p110 = por %p108, %p109
      %s112 = sadd.s32 %s111, 1
      %p115 = scmp.eq.s32.totalorder %s30, 1
      %p116 = scmp.ne.s32.totalorder %s111, %s113
      %p117 = scmp.eq.s32.totalorder %s30, 0
      %p118 = por %p116, %p117
      %p119 = scmp.ne.s32.totalorder %s111, %s113
      %p120 = scmp.eq.s32.totalorder %s35, 1
      %p121 = por %p119, %p120
      %p122 = scmp.ne.s32.totalorder %s113, %s114
      %p123 = scmp.eq.s32.totalorder %s35, 0
      %p124 = por %p122, %p123
      %p125 = scmp.ne.s32.totalorder %s113, %s114
      %p126 = scmp.eq.s32.totalorder %s36, 1
      %p127 = por %p125, %p126
      %p129 = scmp.ne.s32.totalorder %s114, %s128
      %p130 = scmp.eq.s32.totalorder %s36, 0
      %p131 = por %p129, %p130
      %s133 = sadd.s32 %s132, 1
      %p136 = scmp.eq.s32.totalorder %s30, 1
      %p137 = scmp.ne.s32.totalorder %s132, %s134
      %p138 = scmp.eq.s32.totalorder %s30, 0
      %p139 = por %p137, %p138
      %p140 = scmp.ne.s32.totalorder %s132, %s134
      %p141 = scmp.eq.s32.totalorder %s35, 1
      %p142 = por %p140, %p141
      %p143 = scmp.ne.s32.totalorder %s134, %s135
      %p144 = scmp.eq.s32.totalorder %s35, 0
      %p145 = por %p143, %p144
      %p146 = scmp.ne.s32.totalorder %s134, %s135
      %p147 = scmp.eq.s32.totalorder %s36, 1
      %p148 = por %p146, %p147
      %p150 = scmp.ne.s32.totalorder %s135, %s149
      %p151 = scmp.eq.s32.totalorder %s36, 0
      %p152 = por %p150, %p151
      %s154 = sadd.s32 %s153, 1
      %p157 = scmp.eq.s32.totalorder %s30, 1
      %p158 = scmp.ne.s32.totalorder %s153, %s155
      %p159 = scmp.eq.s32.totalorder %s30, 0
      %p160 = por %p158, %p159
      %p161 = scmp.ne.s32.totalorder %s153, %s155
      %p162 = scmp.eq.s32.totalorder %s35, 1
      %p163 = por %p161, %p162
      %p164 = scmp.ne.s32.totalorder %s155, %s156
      %p165 = scmp.eq.s32.totalorder %s35, 0
      %p166 = por %p164, %p165
      %p167 = scmp.ne.s32.totalorder %s155, %s156
      %p168 = scmp.eq.s32.totalorder %s36, 1
      %p169 = por %p167, %p168
      %p171 = scmp.ne.s32.totalorder %s156, %s170
      %p172 = scmp.eq.s32.totalorder %s36, 0
      %p173 = por %p171, %p172
      %s175 = sadd.s32 %s174, 1
      %p178 = scmp.eq.s32.totalorder %s30, 1
      %p179 = scmp.ne.s32.totalorder %s174, %s176
      %p180 = scmp.eq.s32.totalorder %s30, 0
      %p181 = por %p179, %p180
      %p182 = scmp.ne.s32.totalorder %s174, %s176
      %p183 = scmp.eq.s32.totalorder %s35, 1
      %p184 = por %p182, %p183
      %p185 = scmp.ne.s32.totalorder %s176, %s177
      %p186 = scmp.eq.s32.totalorder %s35, 0
      %p187 = por %p185, %p186
      %p188 = scmp.ne.s32.totalorder %s176, %s177
      %p189 = scmp.eq.s32.totalorder %s36, 1
      %p190 = por %p188, %p189
      %p192 = scmp.ne.s32.totalorder %s177, %s191
      %p193 = scmp.eq.s32.totalorder %s36, 0
      %p194 = por %p192, %p193
      %s196 = sadd.s32 %s195, 1
      %p199 = scmp.eq.s32.totalorder %s30, 1
      %p200 = scmp.ne.s32.totalorder %s195, %s197
      %p201 = scmp.eq.s32.totalorder %s30, 0
      %p202 = por %p200, %p201
      %p203 = scmp.ne.s32.totalorder %s195, %s197
      %p204 = scmp.eq.s32.totalorder %s35, 1
      %p205 = por %p203, %p204
      %p206 = scmp.ne.s32.totalorder %s197, %s198
      %p207 = scmp.eq.s32.totalorder %s35, 0
      %p208 = por %p206, %p207
      %p209 = scmp.ne.s32.totalorder %s197, %s198
      %p210 = scmp.eq.s32.totalorder %s36, 1
      %p211 = por %p209, %p210
      %p213 = scmp.ne.s32.totalorder %s198, %s212
      %p214 = scmp.eq.s32.totalorder %s36, 0
      %p215 = por %p213, %p214
      %s217 = sadd.s32 %s216, 1
      %p220 = scmp.eq.s32.totalorder %s30, 1
      %p221 = scmp.ne.s32.totalorder %s216, %s218
      %p222 = scmp.eq.s32.totalorder %s30, 0
      %p223 = por %p221, %p222
      %p224 = scmp.ne.s32.totalorder %s216, %s218
      %p225 = scmp.eq.s32.totalorder %s35, 1
      %p226 = por %p224, %p225
      %p227 = scmp.ne.s32.totalorder %s218, %s219
      %p228 = scmp.eq.s32.totalorder %s35, 0
      %p229 = por %p227, %p228
      %p230 = scmp.ne.s32.totalorder %s218, %s219
      %p231 = scmp.eq.s32.totalorder %s36, 1
      %p232 = por %p230, %p231
      %p234 = scmp.ne.s32.totalorder %s219, %s233
      %p235 = scmp.eq.s32.totalorder %s36, 0
      %p236 = por %p234, %p235
      %s238 = sadd.s32 %s237, 1
      %p241 = scmp.eq.s32.totalorder %s30, 1
      %p242 = scmp.ne.s32.totalorder %s237, %s239
      %p243 = scmp.eq.s32.totalorder %s30, 0
      %p244 = por %p242, %p243
      %p245 = scmp.ne.s32.totalorder %s237, %s239
      %p246 = scmp.eq.s32.totalorder %s35, 1
      %p247 = por %p245, %p246
      %p248 = scmp.ne.s32.totalorder %s239, %s240
      %p249 = scmp.eq.s32.totalorder %s35, 0
      %p250 = por %p248, %p249
      %p251 = scmp.ne.s32.totalorder %s239, %s240
      %p252 = scmp.eq.s32.totalorder %s36, 1
      %p253 = por %p251, %p252
      %p255 = scmp.ne.s32.totalorder %s240, %s254
      %p256 = scmp.eq.s32.totalorder %s36, 0
      %p257 = por %p255, %p256
      %s259 = sadd.s32 %s258, 1
      %p262 = scmp.eq.s32.totalorder %s30, 1
      %p263 = scmp.ne.s32.totalorder %s258, %s260
      %p264 = scmp.eq.s32.totalorder %s30, 0
      %p265 = por %p263, %p264
      %p266 = scmp.ne.s32.totalorder %s258, %s260
      %p267 = scmp.eq.s32.totalorder %s35, 1
      %p268 = por %p266, %p267
      %p269 = scmp.ne.s32.totalorder %s260, %s261
      %p270 = scmp.eq.s32.totalorder %s35, 0
      %p271 = por %p269, %p270
      %p272 = scmp.ne.s32.totalorder %s260, %s261
      %p273 = scmp.eq.s32.totalorder %s36, 1
      %p274 = por %p272, %p273
      %p276 = scmp.ne.s32.totalorder %s261, %s275
      %p277 = scmp.eq.s32.totalorder %s36, 0
      %p278 = por %p276, %p277
      %s279 = ssub.s32 %s30, %s37
      %p280 = scmp.eq.s32.totalorder %s279, 0
      %s282 = sadd.s32 %s281, 1
      %s283 = scalar_select %p280, %s281, %s282
      %p286 = pneg %p280
      %p287 = scmp.eq.s32.totalorder %s30, 1
      %p288 = por %p286, %p287
      %p289 = scmp.ne.s32.totalorder %s281, %s284
      %p290 = scmp.eq.s32.totalorder %s30, 0
      %p291 = por %p289, %p290
      %p292 = scmp.ne.s32.totalorder %s281, %s284
      %p293 = scmp.eq.s32.totalorder %s35, 1
      %p294 = por %p292, %p293
      %p295 = scmp.ne.s32.totalorder %s284, %s285
      %p296 = scmp.eq.s32.totalorder %s35, 0
      %p297 = por %p295, %p296
      %p298 = scmp.ne.s32.totalorder %s284, %s285
      %p299 = scmp.eq.s32.totalorder %s36, 1
      %p300 = por %p298, %p299
      %p302 = scmp.ne.s32.totalorder %s285, %s301
      %p303 = scmp.eq.s32.totalorder %s36, 0
      %p304 = por %p302, %p303
      %p305 = scmp.le.s32.totalorder 1, %s30
      %p306 = scmp.lt.s32.totalorder %s30, 3
      %p307 = pnand %p305, %p306
      %p308 = pneg %p307
      // Predicated region
      $region9: #{tpu_custom_call.1} parent=5 // pred_check
        _
      $region10: #{tpu_custom_call.1} parent=5 // pred_check_branch
        %310 = sbr.rel (%p307) target = $region12
      $region11: #{tpu_custom_call.1} parent=5 // pred_region
        %s311 = ssub.s32 %s30, 1
        // Predicated region
        $region13: #{tpu_custom_call.1} parent=11 // pred_check
          %p312 = pneg %p103
        $region14: #{tpu_custom_call.1} parent=11 // pred_check_branch
          %314 = sbr.rel (%p312) target = $region16
        $region15: #{tpu_custom_call.1} parent=11 // pred_region
          %s316 = ssub.s32 384, 384
          %317 = vsyncadd [#allocation7], %s316
          %s318 = sshll.u32 [#allocation8], 4
          %s319 = int_to_ptr.vmem [resolvable:$true] %s318
          %324 = dma.hbm_to_vmem [thread:$0]  %s2, 384, %s319, [#allocation7], 128, 128, 8
        $region16: #{tpu_custom_call.1} parent=11 // pred_fallthru
          _
        // Predicated region
        $region17: #{tpu_custom_call.1} parent=11 // pred_check
          %p325 = pneg %p124
        $region18: #{tpu_custom_call.1} parent=11 // pred_check_branch
          %327 = sbr.rel (%p325) target = $region20
        $region19: #{tpu_custom_call.1} parent=11 // pred_region
          %s329 = ssub.s32 4096, 4096
          %330 = vsyncadd [#allocation10], %s329
          %s331 = sshll.u32 [#allocation9], 4
          %s332 = int_to_ptr.vmem [resolvable:$true] %s331
          %337 = dma.hbm_to_vmem [thread:$0]  %s3, 4096, %s332, [#allocation10], 256, 256, 16
        $region20: #{tpu_custom_call.1} parent=11 // pred_fallthru
          _
        // Predicated region
        $region21: #{tpu_custom_call.1} parent=11 // pred_check
          %p338 = pneg %p145
        $region22: #{tpu_custom_call.1} parent=11 // pred_check_branch
          %340 = sbr.rel (%p338) target = $region24
        $region23: #{tpu_custom_call.1} parent=11 // pred_region
          %s342 = ssub.s32 4096, 4096
          %343 = vsyncadd [#allocation10], %s342
          %s344 = sshll.u32 [#allocation11], 4
          %s345 = int_to_ptr.vmem [resolvable:$true] %s344
          %350 = dma.hbm_to_vmem [thread:$0]  %s4, 4096, %s345, [#allocation10], 256, 256, 16
        $region24: #{tpu_custom_call.1} parent=11 // pred_fallthru
          _
        // Predicated region
        $region25: #{tpu_custom_call.1} parent=11 // pred_check
          %p351 = pneg %p166
        $region26: #{tpu_custom_call.1} parent=11 // pred_check_branch
          %353 = sbr.rel (%p351) target = $region28
        $region27: #{tpu_custom_call.1} parent=11 // pred_region
          _
        $region28: #{tpu_custom_call.1} parent=11 // pred_fallthru
          _
        // Predicated region
        $region29: #{tpu_custom_call.1} parent=11 // pred_check
          %p354 = pneg %p187
        $region30: #{tpu_custom_call.1} parent=11 // pred_check_branch
          %356 = sbr.rel (%p354) target = $region32
        $region31: #{tpu_custom_call.1} parent=11 // pred_region
          %s358 = ssub.s32 4096, 4096
          %359 = vsyncadd [#allocation13], %s358
          %s360 = sshll.u32 [#allocation12], 4
          %s361 = int_to_ptr.vmem [resolvable:$true] %s360
          %366 = dma.hbm_to_vmem [thread:$0]  %s6, 4096, %s361, [#allocation13], 64, 64, 4
        $region32: #{tpu_custom_call.1} parent=11 // pred_fallthru
          _
        // Predicated region
        $region33: #{tpu_custom_call.1} parent=11 // pred_check
          %p367 = pneg %p208
        $region34: #{tpu_custom_call.1} parent=11 // pred_check_branch
          %369 = sbr.rel (%p367) target = $region36
        $region35: #{tpu_custom_call.1} parent=11 // pred_region
          _
        $region36: #{tpu_custom_call.1} parent=11 // pred_fallthru
          _
        // Predicated region
        $region37: #{tpu_custom_call.1} parent=11 // pred_check
          %p370 = pneg %p229
        $region38: #{tpu_custom_call.1} parent=11 // pred_check_branch
          %372 = sbr.rel (%p370) target = $region40
        $region39: #{tpu_custom_call.1} parent=11 // pred_region
          _
        $region40: #{tpu_custom_call.1} parent=11 // pred_fallthru
          _
        // Predicated region
        $region41: #{tpu_custom_call.1} parent=11 // pred_check
          %p373 = pneg %p250
        $region42: #{tpu_custom_call.1} parent=11 // pred_check_branch
          %375 = sbr.rel (%p373) target = $region44
        $region43: #{tpu_custom_call.1} parent=11 // pred_region
          _
        $region44: #{tpu_custom_call.1} parent=11 // pred_fallthru
          _
        // Predicated region
        $region45: #{tpu_custom_call.1} parent=11 // pred_check
          %p376 = pneg %p271
        $region46: #{tpu_custom_call.1} parent=11 // pred_check_branch
          %378 = sbr.rel (%p376) target = $region48
        $region47: #{tpu_custom_call.1} parent=11 // pred_region
          _
        $region48: #{tpu_custom_call.1} parent=11 // pred_fallthru
          _
      $region12: #{tpu_custom_call.1} parent=5 // pred_fallthru
        _
      %p379 = scmp.lt.s32.totalorder %s30, 2
      // Predicated region
      $region49: #{tpu_custom_call.1} parent=5 // pred_check
        %p380 = pneg %p379
      $region50: #{tpu_custom_call.1} parent=5 // pred_check_branch
        %382 = sbr.rel (%p380) target = $region52
      $region51: #{tpu_custom_call.1} parent=5 // pred_region
        // Predicated region
        $region53: #{tpu_custom_call.1} parent=51 // pred_check
          %p383 = pneg %p50
        $region54: #{tpu_custom_call.1} parent=51 // pred_check_branch
          %385 = sbr.rel (%p383) target = $region56
        $region55: #{tpu_custom_call.1} parent=51 // pred_region
          %s386 = sand.u32 %s40, 1
          %s387 = scalar_lea.sflag [#allocation4], %s386
          %s388 = sand.u32 %s40, 1
          %s389 = smul.addr %s388, 24
          %s390 = scalar_lea.vmem [#allocation3], %s389
          %s392 = ssub.s32 384, 384
          %393 = vsyncadd %s387, %s392
          %s394 = smul.addr %s30, 3
          %s395 = smul.addr %s394, 128
          %s396 = scalar_lea.hbm %s0, %s395
          %s397 = sshll.u32 %s390, 4
          %s398 = int_to_ptr.vmem [resolvable:$true] %s397
          %403 = dma.hbm_to_vmem [thread:$0]  %s396, 384, %s398, %s387, 128, 128, 8
        $region56: #{tpu_custom_call.1} parent=51 // pred_fallthru
          _
        // Predicated region
        $region57: #{tpu_custom_call.1} parent=51 // pred_check
          %p404 = pneg %p76
        $region58: #{tpu_custom_call.1} parent=51 // pred_check_branch
          %406 = sbr.rel (%p404) target = $region60
        $region59: #{tpu_custom_call.1} parent=51 // pred_region
          %s407 = sand.u32 %s30, 1
          %s408 = scalar_lea.sflag [#allocation7], %s407
          %s409 = sand.u32 %s66, 1
          %s410 = smul.addr %s409, 128
          %s411 = scalar_lea.vmem [#allocation6], %s410
          %s413 = ssub.s32 2048, 2048
          %414 = vsyncadd %s408, %s413
          %s415 = smul.addr %s30, 32
          %s416 = smul.addr %s415, 64
          %s417 = scalar_lea.hbm %s1, %s416
          %s418 = sshll.u32 %s411, 4
          %s419 = int_to_ptr.vmem [resolvable:$true] %s418
          %424 = dma.hbm_to_vmem [thread:$0]  %s417, 2048, %s419, %s408, 64, 64, 4
        $region60: #{tpu_custom_call.1} parent=51 // pred_fallthru
          _
      $region52: #{tpu_custom_call.1} parent=5 // pred_fallthru
        _
      %p425 = scmp.le.s32.totalorder 1, %s30
      %p426 = scmp.lt.s32.totalorder %s30, 3
      %p427 = pnand %p425, %p426
      %p428 = pneg %p427
      // Predicated region
      $region61: #{tpu_custom_call.1} parent=5 // pred_check
        _
      $region62: #{tpu_custom_call.1} parent=5 // pred_check_branch
        %430 = sbr.rel (%p427) target = $region64
      $region63: #{tpu_custom_call.1} parent=5 // pred_region
        %s431 = ssub.s32 %s30, 1
        %s432 = sand.u32 %s43, 1
        %s433 = scalar_lea.sflag [#allocation4], %s432
        %s434 = sand.u32 %s43, 1
        %s435 = smul.addr %s434, 24
        %s436 = scalar_lea.vmem [#allocation3], %s435
        // Predicated region
        $region65: #{tpu_custom_call.1} parent=63 // pred_check
          %p437 = pneg %p56
        $region66: #{tpu_custom_call.1} parent=63 // pred_check_branch
          %439 = sbr.rel (%p437) target = $region68
        $region67: #{tpu_custom_call.1} parent=63 // pred_region
          %440 = dma.done %s433, 384
        $region68: #{tpu_custom_call.1} parent=63 // pred_fallthru
          _
        %s441 = sand.u32 %s35, 1
        %s442 = scalar_lea.sflag [#allocation7], %s441
        %s443 = sand.u32 %s69, 1
        %s444 = smul.addr %s443, 128
        %s445 = scalar_lea.vmem [#allocation6], %s444
        // Predicated region
        $region69: #{tpu_custom_call.1} parent=63 // pred_check
          %p446 = pneg %p82
        $region70: #{tpu_custom_call.1} parent=63 // pred_check_branch
          %448 = sbr.rel (%p446) target = $region72
        $region71: #{tpu_custom_call.1} parent=63 // pred_region
          %449 = dma.done %s442, 2048
        $region72: #{tpu_custom_call.1} parent=63 // pred_fallthru
          _
        // Predicated region
        $region73: #{tpu_custom_call.1} parent=63 // pred_check
          %p450 = pneg %p103
        $region74: #{tpu_custom_call.1} parent=63 // pred_check_branch
          %452 = sbr.rel (%p450) target = $region76
        $region75: #{tpu_custom_call.1} parent=63 // pred_region
          %453 = dma.done [#allocation7], 384
        $region76: #{tpu_custom_call.1} parent=63 // pred_fallthru
          _
        // Predicated region
        $region77: #{tpu_custom_call.1} parent=63 // pred_check
          %p454 = pneg %p124
        $region78: #{tpu_custom_call.1} parent=63 // pred_check_branch
          %456 = sbr.rel (%p454) target = $region80
        $region79: #{tpu_custom_call.1} parent=63 // pred_region
          %457 = dma.done [#allocation10], 4096
        $region80: #{tpu_custom_call.1} parent=63 // pred_fallthru
          _
        // Predicated region
        $region81: #{tpu_custom_call.1} parent=63 // pred_check
          %p458 = pneg %p145
        $region82: #{tpu_custom_call.1} parent=63 // pred_check_branch
          %460 = sbr.rel (%p458) target = $region84
        $region83: #{tpu_custom_call.1} parent=63 // pred_region
          %461 = dma.done [#allocation10], 4096
        $region84: #{tpu_custom_call.1} parent=63 // pred_fallthru
          _
        // Predicated region
        $region85: #{tpu_custom_call.1} parent=63 // pred_check
          %p462 = pneg %p187
        $region86: #{tpu_custom_call.1} parent=63 // pred_check_branch
          %464 = sbr.rel (%p462) target = $region88
        $region87: #{tpu_custom_call.1} parent=63 // pred_region
          %465 = dma.done [#allocation13], 4096
        $region88: #{tpu_custom_call.1} parent=63 // pred_fallthru
          _
        %s466 = sand.u32 %s43, 1
        %s467 = scalar_lea.sflag [#allocation4], %s466
        %s468 = sand.u32 %s43, 1
        %s469 = smul.addr %s468, 24
        %s470 = scalar_lea.vmem [#allocation3], %s469
        %p471 = pneg %p56
        %p472 = pneg %p53
        %s473 = sand.u32 %s35, 1
        %s474 = scalar_lea.sflag [#allocation7], %s473
        %s475 = sand.u32 %s69, 1
        %s476 = smul.addr %s475, 128
        %s477 = scalar_lea.vmem [#allocation6], %s476
        %p478 = pneg %p82
        %p479 = pneg %p79
        %p480 = pneg %p103
        %p481 = pneg %p100
        %p482 = pneg %p124
        %p483 = pneg %p121
        %p484 = pneg %p145
        %p485 = pneg %p142
        %p486 = pneg %p166
        %p487 = pneg %p163
        %p488 = pneg %p187
        %p489 = pneg %p184
        %p490 = pneg %p208
        %p491 = pneg %p205
        %p492 = pneg %p229
        %p493 = pneg %p226
        %p494 = pneg %p250
        %p495 = pneg %p247
        %p496 = pneg %p271
        %p497 = pneg %p268
        %p498 = pneg %p297
        %p499 = pneg %p294
        %s500 = sand.u32 %s284, 1
        %s501 = scalar_lea.sflag [#allocation5], %s500
        %s502 = sand.u32 %s284, 1
        %s503 = smul.addr %s502, 24
        %s504 = scalar_lea.vmem [#allocation14], %s503
        %v506 = vld [vmem:[%s436] sm:$0xff]
        %v507 = vld [vmem:[%s436 + $0x8] sm:$0xff]
        %v508 = vld [vmem:[%s436 + $0x10] sm:$0xff]
        %v509 = vld [vmem:[#allocation8] sm:$0xff]
        %v510 = vld [vmem:[#allocation8 + $0x8] sm:$0xff]
        %v511 = vld [vmem:[#allocation8 + $0x10] sm:$0xff]
        %v512 = vld [vmem:[%s445] sm:$0xf]
        %v513 = vld [vmem:[%s445 + $0x4] sm:$0xf]
        %v514 = vld [vmem:[%s445 + $0x8] sm:$0xf]
        %v515 = vld [vmem:[%s445 + $0xc] sm:$0xf]
        %v516 = vld [vmem:[%s445 + $0x10] sm:$0xf]
        %v517 = vld [vmem:[%s445 + $0x14] sm:$0xf]
        %v518 = vld [vmem:[%s445 + $0x18] sm:$0xf]
        %v519 = vld [vmem:[%s445 + $0x1c] sm:$0xf]
        %v520 = vld [vmem:[%s445 + $0x20] sm:$0xf]
        %v521 = vld [vmem:[%s445 + $0x24] sm:$0xf]
        %v522 = vld [vmem:[%s445 + $0x28] sm:$0xf]
        %v523 = vld [vmem:[%s445 + $0x2c] sm:$0xf]
        %v524 = vld [vmem:[%s445 + $0x30] sm:$0xf]
        %v525 = vld [vmem:[%s445 + $0x34] sm:$0xf]
        %v526 = vld [vmem:[%s445 + $0x38] sm:$0xf]
        %v527 = vld [vmem:[%s445 + $0x3c] sm:$0xf]
        %v528 = vld [vmem:[%s445 + $0x40] sm:$0xf]
        %v529 = vld [vmem:[%s445 + $0x44] sm:$0xf]
        %v530 = vld [vmem:[%s445 + $0x48] sm:$0xf]
        %v531 = vld [vmem:[%s445 + $0x4c] sm:$0xf]
        %v532 = vld [vmem:[%s445 + $0x50] sm:$0xf]
        %v533 = vld [vmem:[%s445 + $0x54] sm:$0xf]
        %v534 = vld [vmem:[%s445 + $0x58] sm:$0xf]
        %v535 = vld [vmem:[%s445 + $0x5c] sm:$0xf]
        %v536 = vld [vmem:[%s445 + $0x60] sm:$0xf]
        %v537 = vld [vmem:[%s445 + $0x64] sm:$0xf]
        %v538 = vld [vmem:[%s445 + $0x68] sm:$0xf]
        %v539 = vld [vmem:[%s445 + $0x6c] sm:$0xf]
        %v540 = vld [vmem:[%s445 + $0x70] sm:$0xf]
        %v541 = vld [vmem:[%s445 + $0x74] sm:$0xf]
        %v542 = vld [vmem:[%s445 + $0x78] sm:$0xf]
        %v543 = vld [vmem:[%s445 + $0x7c] sm:$0xf]
        %v547 = vunpack.c.l.b16 %v509
        %v548 = vunpack.c.h.b16 %v509
        %v549 = vunpack.c.l.b16 %v510
        %v550 = vunpack.c.h.b16 %v510
        %v551 = vunpack.c.l.b16 %v511
        %v552 = vunpack.c.h.b16 %v511
        %v553 = vpack.c.b16 %v549, %v547
        %v554 = vpack.c.b16 %v550, %v548
        %v555 = vpack.c.b16 %v551, %v551
        %v556 = vpack.c.b16 %v552, %v552
        %v593 = vunpack.c.l.b16 %v512
        %v594 = vunpack.c.l.b16 %v513
        %v595 = vunpack.c.l.b16 %v514
        %v596 = vunpack.c.l.b16 %v515
        %v597 = vunpack.c.l.b16 %v516
        %v598 = vunpack.c.l.b16 %v517
        %v599 = vunpack.c.l.b16 %v518
        %v600 = vunpack.c.l.b16 %v519
        %v601 = vunpack.c.l.b16 %v520
        %v602 = vunpack.c.l.b16 %v521
        %v603 = vunpack.c.l.b16 %v522
        %v604 = vunpack.c.l.b16 %v523
        %v605 = vunpack.c.l.b16 %v524
        %v606 = vunpack.c.l.b16 %v525
        %v607 = vunpack.c.l.b16 %v526
        %v608 = vunpack.c.l.b16 %v527
        %v609 = vunpack.c.l.b16 %v528
        %v610 = vunpack.c.l.b16 %v529
        %v611 = vunpack.c.l.b16 %v530
        %v612 = vunpack.c.l.b16 %v531
        %v613 = vunpack.c.l.b16 %v532
        %v614 = vunpack.c.l.b16 %v533
        %v615 = vunpack.c.l.b16 %v534
        %v616 = vunpack.c.l.b16 %v535
        %v617 = vunpack.c.l.b16 %v536
        %v618 = vunpack.c.l.b16 %v537
        %v619 = vunpack.c.l.b16 %v538
        %v620 = vunpack.c.l.b16 %v539
        %v621 = vunpack.c.l.b16 %v540
        %v622 = vunpack.c.l.b16 %v541
        %v623 = vunpack.c.l.b16 %v542
        %v624 = vunpack.c.l.b16 %v543
        %v625 = vpack.c.b16 %v594, %v593
        %v626 = vpack.c.b16 %v596, %v595
        %v627 = vpack.c.b16 %v598, %v597
        %v628 = vpack.c.b16 %v600, %v599
        %v629 = vpack.c.b16 %v602, %v601
        %v630 = vpack.c.b16 %v604, %v603
        %v631 = vpack.c.b16 %v606, %v605
        %v632 = vpack.c.b16 %v608, %v607
        %v633 = vpack.c.b16 %v610, %v609
        %v634 = vpack.c.b16 %v612, %v611
        %v635 = vpack.c.b16 %v614, %v613
        %v636 = vpack.c.b16 %v616, %v615
        %v637 = vpack.c.b16 %v618, %v617
        %v638 = vpack.c.b16 %v620, %v619
        %v639 = vpack.c.b16 %v622, %v621
        %v640 = vpack.c.b16 %v624, %v623
        %657 = vmatprep.subr.bf16.mxu0 0
        %658 = vmatpush1.bf16.msra.mxu0 %v625
        %659 = vmatprep.subr.bf16.mxu0 0
        %660 = vmatpush1.bf16.msra.mxu0 %v626
        %661 = vmatprep.subr.bf16.mxu0 0
        %662 = vmatpush1.bf16.msra.mxu0 %v627
        %663 = vmatprep.subr.bf16.mxu0 0
        %664 = vmatpush1.bf16.msra.mxu0 %v628
        %665 = vmatprep.subr.bf16.mxu0 0
        %666 = vmatpush1.bf16.msra.mxu0 %v629
        %667 = vmatprep.subr.bf16.mxu0 0
        %668 = vmatpush1.bf16.msra.mxu0 %v630
        %669 = vmatprep.subr.bf16.mxu0 0
        %670 = vmatpush1.bf16.msra.mxu0 %v631
        %671 = vmatprep.subr.bf16.mxu0 0
        %672 = vmatpush1.bf16.msra.mxu0 %v632
        %673 = vmatprep.subr.bf16.mxu0 0
        %674 = vmatpush1.bf16.msra.mxu0 %v633
        %675 = vmatprep.subr.bf16.mxu0 0
        %676 = vmatpush1.bf16.msra.mxu0 %v634
        %677 = vmatprep.subr.bf16.mxu0 0
        %678 = vmatpush1.bf16.msra.mxu0 %v635
        %679 = vmatprep.subr.bf16.mxu0 0
        %680 = vmatpush1.bf16.msra.mxu0 %v636
        %681 = vmatprep.subr.bf16.mxu0 0
        %682 = vmatpush1.bf16.msra.mxu0 %v637
        %683 = vmatprep.subr.bf16.mxu0 0
        %684 = vmatpush1.bf16.msra.mxu0 %v638
        %685 = vmatprep.subr.bf16.mxu0 0
        %686 = vmatpush1.bf16.msra.mxu0 %v639
        %687 = vmatprep.subr.bf16.mxu0 0
        %688 = vmatpush1.bf16.msra.mxu0 %v640
        %689 = vmatprep.mubr.bf16.mxu0 %v554
        %690 = vmatmul.mubr.bf16.gmra.mrb[0].mxu0 %v553
        %v691 = vpop.f32.mrb[0].mxu0
        %v692 = vadd.f32 0.0, %v691
        %v693 = vpop.f32.mrb[0].mxu0
        %v694 = vpop.f32.mrb[0].mxu0
        %v695 = vadd.f32 0.0, %v694
        %v696 = vpop.f32.mrb[0].mxu0
        %697 = vmatprep.mubr.bf16.mxu0 %v556
        %698 = vmatmul.mubr.bf16.gmra.mrb[0].mxu0 %v555
        %v699 = vpop.f32.mrb[0].mxu0
        %v700 = vadd.f32 0.0, %v699
        %v701 = vpop.f32.mrb[0].mxu0
        %v702 = vpop.f32.mrb[0].mxu0
        %v703 = vpop.f32.mrb[0].mxu0
        %704 = vdwg.mxu0
        %v705 = vpack.c.bf16 %v507, %v506
        %v706 = vpack.c.bf16 %v508, %v508
        %v707 = vld [vmem:[#allocation9] sm:$0xff]
        %v708 = vld [vmem:[#allocation9 + $0x8] sm:$0xff]
        %v709 = vld [vmem:[#allocation9 + $0x10] sm:$0xff]
        %v710 = vld [vmem:[#allocation9 + $0x18] sm:$0xff]
        %v711 = vld [vmem:[#allocation9 + $0x20] sm:$0xff]
        %v712 = vld [vmem:[#allocation9 + $0x28] sm:$0xff]
        %v713 = vld [vmem:[#allocation9 + $0x30] sm:$0xff]
        %v714 = vld [vmem:[#allocation9 + $0x38] sm:$0xff]
        %v715 = vld [vmem:[#allocation9 + $0x40] sm:$0xff]
        %v716 = vld [vmem:[#allocation9 + $0x48] sm:$0xff]
        %v717 = vld [vmem:[#allocation9 + $0x50] sm:$0xff]
        %v718 = vld [vmem:[#allocation9 + $0x58] sm:$0xff]
        %v719 = vld [vmem:[#allocation9 + $0x60] sm:$0xff]
        %v720 = vld [vmem:[#allocation9 + $0x68] sm:$0xff]
        %v721 = vld [vmem:[#allocation9 + $0x70] sm:$0xff]
        %v722 = vld [vmem:[#allocation9 + $0x78] sm:$0xff]
        %v723 = vld [vmem:[#allocation9 + $0x80] sm:$0xff]
        %v724 = vld [vmem:[#allocation9 + $0x88] sm:$0xff]
        %v725 = vld [vmem:[#allocation9 + $0x90] sm:$0xff]
        %v726 = vld [vmem:[#allocation9 + $0x98] sm:$0xff]
        %v727 = vld [vmem:[#allocation9 + $0xa0] sm:$0xff]
        %v728 = vld [vmem:[#allocation9 + $0xa8] sm:$0xff]
        %v729 = vld [vmem:[#allocation9 + $0xb0] sm:$0xff]
        %v730 = vld [vmem:[#allocation9 + $0xb8] sm:$0xff]
        %v731 = vld [vmem:[#allocation9 + $0xc0] sm:$0xff]
        %v732 = vld [vmem:[#allocation9 + $0xc8] sm:$0xff]
        %v733 = vld [vmem:[#allocation9 + $0xd0] sm:$0xff]
        %v734 = vld [vmem:[#allocation9 + $0xd8] sm:$0xff]
        %v735 = vld [vmem:[#allocation9 + $0xe0] sm:$0xff]
        %v736 = vld [vmem:[#allocation9 + $0xe8] sm:$0xff]
        %v737 = vld [vmem:[#allocation9 + $0xf0] sm:$0xff]
        %v738 = vld [vmem:[#allocation9 + $0xf8] sm:$0xff]
        %v739 = vpack.c.bf16 %v695, %v692
        %v740 = vpack.c.bf16 %v700, %v700
        %v741 = vld [vmem:[#allocation11] sm:$0xff]
        %v742 = vld [vmem:[#allocation11 + $0x8] sm:$0xff]
        %v743 = vld [vmem:[#allocation11 + $0x10] sm:$0xff]
        %v744 = vld [vmem:[#allocation11 + $0x18] sm:$0xff]
        %v745 = vld [vmem:[#allocation11 + $0x20] sm:$0xff]
        %v746 = vld [vmem:[#allocation11 + $0x28] sm:$0xff]
        %v747 = vld [vmem:[#allocation11 + $0x30] sm:$0xff]
        %v748 = vld [vmem:[#allocation11 + $0x38] sm:$0xff]
        %v749 = vld [vmem:[#allocation11 + $0x40] sm:$0xff]
        %v750 = vld [vmem:[#allocation11 + $0x48] sm:$0xff]
        %v751 = vld [vmem:[#allocation11 + $0x50] sm:$0xff]
        %v752 = vld [vmem:[#allocation11 + $0x58] sm:$0xff]
        %v753 = vld [vmem:[#allocation11 + $0x60] sm:$0xff]
        %v754 = vld [vmem:[#allocation11 + $0x68] sm:$0xff]
        %v755 = vld [vmem:[#allocation11 + $0x70] sm:$0xff]
        %v756 = vld [vmem:[#allocation11 + $0x78] sm:$0xff]
        %v757 = vld [vmem:[#allocation11 + $0x80] sm:$0xff]
        %v758 = vld [vmem:[#allocation11 + $0x88] sm:$0xff]
        %v759 = vld [vmem:[#allocation11 + $0x90] sm:$0xff]
        %v760 = vld [vmem:[#allocation11 + $0x98] sm:$0xff]
        %v761 = vld [vmem:[#allocation11 + $0xa0] sm:$0xff]
        %v762 = vld [vmem:[#allocation11 + $0xa8] sm:$0xff]
        %v763 = vld [vmem:[#allocation11 + $0xb0] sm:$0xff]
        %v764 = vld [vmem:[#allocation11 + $0xb8] sm:$0xff]
        %v765 = vld [vmem:[#allocation11 + $0xc0] sm:$0xff]
        %v766 = vld [vmem:[#allocation11 + $0xc8] sm:$0xff]
        %v767 = vld [vmem:[#allocation11 + $0xd0] sm:$0xff]
        %v768 = vld [vmem:[#allocation11 + $0xd8] sm:$0xff]
        %v769 = vld [vmem:[#allocation11 + $0xe0] sm:$0xff]
        %v770 = vld [vmem:[#allocation11 + $0xe8] sm:$0xff]
        %v771 = vld [vmem:[#allocation11 + $0xf0] sm:$0xff]
        %v772 = vld [vmem:[#allocation11 + $0xf8] sm:$0xff]
        %v805 = vunpack.c.l.b16 %v741
        %v806 = vunpack.c.h.b16 %v741
        %v807 = vunpack.c.l.b16 %v742
        %v808 = vunpack.c.h.b16 %v742
        %v809 = vunpack.c.l.b16 %v743
        %v810 = vunpack.c.h.b16 %v743
        %v811 = vunpack.c.l.b16 %v744
        %v812 = vunpack.c.h.b16 %v744
        %v813 = vunpack.c.l.b16 %v745
        %v814 = vunpack.c.h.b16 %v745
        %v815 = vunpack.c.l.b16 %v746
        %v816 = vunpack.c.h.b16 %v746
        %v817 = vunpack.c.l.b16 %v747
        %v818 = vunpack.c.h.b16 %v747
        %v819 = vunpack.c.l.b16 %v748
        %v820 = vunpack.c.h.b16 %v748
        %v821 = vunpack.c.l.b16 %v749
        %v822 = vunpack.c.h.b16 %v749
        %v823 = vunpack.c.l.b16 %v750
        %v824 = vunpack.c.h.b16 %v750
        %v825 = vunpack.c.l.b16 %v751
        %v826 = vunpack.c.h.b16 %v751
        %v827 = vunpack.c.l.b16 %v752
        %v828 = vunpack.c.h.b16 %v752
        %v829 = vunpack.c.l.b16 %v753
        %v830 = vunpack.c.h.b16 %v753
        %v831 = vunpack.c.l.b16 %v754
        %v832 = vunpack.c.h.b16 %v754
        %v833 = vunpack.c.l.b16 %v755
        %v834 = vunpack.c.h.b16 %v755
        %v835 = vunpack.c.l.b16 %v756
        %v836 = vunpack.c.h.b16 %v756
        %v837 = vunpack.c.l.b16 %v757
        %v838 = vunpack.c.h.b16 %v757
        %v839 = vunpack.c.l.b16 %v758
        %v840 = vunpack.c.h.b16 %v758
        %v841 = vunpack.c.l.b16 %v759
        %v842 = vunpack.c.h.b16 %v759
        %v843 = vunpack.c.l.b16 %v760
        %v844 = vunpack.c.h.b16 %v760
        %v845 = vunpack.c.l.b16 %v761
        %v846 = vunpack.c.h.b16 %v761
        %v847 = vunpack.c.l.b16 %v762
        %v848 = vunpack.c.h.b16 %v762
        %v849 = vunpack.c.l.b16 %v763
        %v850 = vunpack.c.h.b16 %v763
        %v851 = vunpack.c.l.b16 %v764
        %v852 = vunpack.c.h.b16 %v764
        %v853 = vunpack.c.l.b16 %v765
        %v854 = vunpack.c.h.b16 %v765
        %v855 = vunpack.c.l.b16 %v766
        %v856 = vunpack.c.h.b16 %v766
        %v857 = vunpack.c.l.b16 %v767
        %v858 = vunpack.c.h.b16 %v767
        %v859 = vunpack.c.l.b16 %v768
        %v860 = vunpack.c.h.b16 %v768
        %v861 = vunpack.c.l.b16 %v769
        %v862 = vunpack.c.h.b16 %v769
        %v863 = vunpack.c.l.b16 %v770
        %v864 = vunpack.c.h.b16 %v770
        %v865 = vunpack.c.l.b16 %v771
        %v866 = vunpack.c.h.b16 %v771
        %v867 = vunpack.c.l.b16 %v772
        %v868 = vunpack.c.h.b16 %v772
        %v869 = vpack.c.b16 %v809, %v805
        %v870 = vpack.c.b16 %v810, %v806
        %v871 = vpack.c.b16 %v811, %v807
        %v872 = vpack.c.b16 %v812, %v808
        %v873 = vpack.c.b16 %v817, %v813
        %v874 = vpack.c.b16 %v818, %v814
        %v875 = vpack.c.b16 %v819, %v815
        %v876 = vpack.c.b16 %v820, %v816
        %v877 = vpack.c.b16 %v825, %v821
        %v878 = vpack.c.b16 %v826, %v822
        %v879 = vpack.c.b16 %v827, %v823
        %v880 = vpack.c.b16 %v828, %v824
        %v881 = vpack.c.b16 %v833, %v829
        %v882 = vpack.c.b16 %v834, %v830
        %v883 = vpack.c.b16 %v835, %v831
        %v884 = vpack.c.b16 %v836, %v832
        %v885 = vpack.c.b16 %v841, %v837
        %v886 = vpack.c.b16 %v842, %v838
        %v887 = vpack.c.b16 %v843, %v839
        %v888 = vpack.c.b16 %v844, %v840
        %v889 = vpack.c.b16 %v849, %v845
        %v890 = vpack.c.b16 %v850, %v846
        %v891 = vpack.c.b16 %v851, %v847
        %v892 = vpack.c.b16 %v852, %v848
        %v893 = vpack.c.b16 %v857, %v853
        %v894 = vpack.c.b16 %v858, %v854
        %v895 = vpack.c.b16 %v859, %v855
        %v896 = vpack.c.b16 %v860, %v856
        %v897 = vpack.c.b16 %v865, %v861
        %v898 = vpack.c.b16 %v866, %v862
        %v899 = vpack.c.b16 %v867, %v863
        %v900 = vpack.c.b16 %v868, %v864
        %933 = vmatprep.subr.bf16.mxu0 %v870
        %934 = vmatpush1.bf16.msra.mxu0 %v869
        %935 = vmatprep.subr.bf16.mxu0 %v874
        %936 = vmatpush1.bf16.msra.mxu0 %v873
        %937 = vmatprep.subr.bf16.mxu0 %v878
        %938 = vmatpush1.bf16.msra.mxu0 %v877
        %939 = vmatprep.subr.bf16.mxu0 %v882
        %940 = vmatpush1.bf16.msra.mxu0 %v881
        %941 = vmatprep.subr.bf16.mxu0 %v886
        %942 = vmatpush1.bf16.msra.mxu0 %v885
        %943 = vmatprep.subr.bf16.mxu0 %v890
        %944 = vmatpush1.bf16.msra.mxu0 %v889
        %945 = vmatprep.subr.bf16.mxu0 %v894
        %946 = vmatpush1.bf16.msra.mxu0 %v893
        %947 = vmatprep.subr.bf16.mxu0 %v898
        %948 = vmatpush1.bf16.msra.mxu0 %v897
        %949 = vmatprep.subr.bf16.mxu0 0
        %950 = vmatpush1.bf16.msra.mxu0 0
        %951 = vmatprep.subr.bf16.mxu0 0
        %952 = vmatpush1.bf16.msra.mxu0 0
        %953 = vmatprep.subr.bf16.mxu0 0
        %954 = vmatpush1.bf16.msra.mxu0 0
        %955 = vmatprep.subr.bf16.mxu0 0
        %956 = vmatpush1.bf16.msra.mxu0 0
        %957 = vmatprep.subr.bf16.mxu0 0
        %958 = vmatpush1.bf16.msra.mxu0 0
        %959 = vmatprep.subr.bf16.mxu0 0
        %960 = vmatpush1.bf16.msra.mxu0 0
        %961 = vmatprep.subr.bf16.mxu0 0
        %962 = vmatpush1.bf16.msra.mxu0 0
        %963 = vmatprep.subr.bf16.mxu0 0
        %964 = vmatpush1.bf16.msra.mxu0 0
        %965 = vmatprep.mubr.bf16.mxu0 0
        %966 = vmatmul.mubr.bf16.gmra.mrb[0].mxu0 %v739
        %v967 = vpop.f32.mrb[0].mxu0
        %v968 = vadd.f32 0.0, %v967
        %v969 = vpop.f32.mrb[0].mxu0
        %v970 = vadd.f32 0.0, %v969
        %v971 = vpop.f32.mrb[0].mxu0
        %v972 = vadd.f32 0.0, %v971
        %v973 = vpop.f32.mrb[0].mxu0
        %v974 = vadd.f32 0.0, %v973
        %975 = vmatprep.mubr.bf16.mxu0 0
        %976 = vmatmul.mubr.bf16.gmra.mrb[0].mxu0 %v740
        %v977 = vpop.f32.mrb[0].mxu0
        %v978 = vadd.f32 0.0, %v977
        %v979 = vpop.f32.mrb[0].mxu0
        %v980 = vadd.f32 0.0, %v979
        %v981 = vpop.f32.mrb[0].mxu0
        %v982 = vpop.f32.mrb[0].mxu0
        %983 = vdwg.mxu0
        %984 = vmatprep.subr.bf16.mxu0 %v872
        %985 = vmatpush1.bf16.msra.mxu0 %v871
        %986 = vmatprep.subr.bf16.mxu0 %v876
        %987 = vmatpush1.bf16.msra.mxu0 %v875
        %988 = vmatprep.subr.bf16.mxu0 %v880
        %989 = vmatpush1.bf16.msra.mxu0 %v879
        %990 = vmatprep.subr.bf16.mxu0 %v884
        %991 = vmatpush1.bf16.msra.mxu0 %v883
        %992 = vmatprep.subr.bf16.mxu0 %v888
        %993 = vmatpush1.bf16.msra.mxu0 %v887
        %994 = vmatprep.subr.bf16.mxu0 %v892
        %995 = vmatpush1.bf16.msra.mxu0 %v891
        %996 = vmatprep.subr.bf16.mxu0 %v896
        %997 = vmatpush1.bf16.msra.mxu0 %v895
        %998 = vmatprep.subr.bf16.mxu0 %v900
        %999 = vmatpush1.bf16.msra.mxu0 %v899
        %1000 = vmatprep.subr.bf16.mxu0 0
        %1001 = vmatpush1.bf16.msra.mxu0 0
        %1002 = vmatprep.subr.bf16.mxu0 0
        %1003 = vmatpush1.bf16.msra.mxu0 0
        %1004 = vmatprep.subr.bf16.mxu0 0
        %1005 = vmatpush1.bf16.msra.mxu0 0
        %1006 = vmatprep.subr.bf16.mxu0 0
        %1007 = vmatpush1.bf16.msra.mxu0 0
        %1008 = vmatprep.subr.bf16.mxu0 0
        %1009 = vmatpush1.bf16.msra.mxu0 0
        %1010 = vmatprep.subr.bf16.mxu0 0
        %1011 = vmatpush1.bf16.msra.mxu0 0
        %1012 = vmatprep.subr.bf16.mxu0 0
        %1013 = vmatpush1.bf16.msra.mxu0 0
        %1014 = vmatprep.subr.bf16.mxu0 0
        %1015 = vmatpush1.bf16.msra.mxu0 0
        %1016 = vmatprep.mubr.bf16.mxu0 0
        %1017 = vmatmul.mubr.bf16.gmra.mrb[0].mxu0 %v739
        %v1018 = vpop.f32.mrb[0].mxu0
        %v1019 = vadd.f32 0.0, %v1018
        %v1020 = vpop.f32.mrb[0].mxu0
        %v1021 = vadd.f32 0.0, %v1020
        %v1022 = vpop.f32.mrb[0].mxu0
        %v1023 = vadd.f32 0.0, %v1022
        %v1024 = vpop.f32.mrb[0].mxu0
        %v1025 = vadd.f32 0.0, %v1024
        %1026 = vmatprep.mubr.bf16.mxu0 0
        %1027 = vmatmul.mubr.bf16.gmra.mrb[0].mxu0 %v740
        %v1028 = vpop.f32.mrb[0].mxu0
        %v1029 = vadd.f32 0.0, %v1028
        %v1030 = vpop.f32.mrb[0].mxu0
        %v1031 = vadd.f32 0.0, %v1030
        %v1032 = vpop.f32.mrb[0].mxu0
        %v1033 = vpop.f32.mrb[0].mxu0
        %1034 = vdwg.mxu0
        %v1067 = vunpack.c.l.b16 %v707
        %v1068 = vunpack.c.h.b16 %v707
        %v1069 = vunpack.c.l.b16 %v708
        %v1070 = vunpack.c.h.b16 %v708
        %v1071 = vunpack.c.l.b16 %v709
        %v1072 = vunpack.c.h.b16 %v709
        %v1073 = vunpack.c.l.b16 %v710
        %v1074 = vunpack.c.h.b16 %v710
        %v1075 = vunpack.c.l.b16 %v711
        %v1076 = vunpack.c.h.b16 %v711
        %v1077 = vunpack.c.l.b16 %v712
        %v1078 = vunpack.c.h.b16 %v712
        %v1079 = vunpack.c.l.b16 %v713
        %v1080 = vunpack.c.h.b16 %v713
        %v1081 = vunpack.c.l.b16 %v714
        %v1082 = vunpack.c.h.b16 %v714
        %v1083 = vunpack.c.l.b16 %v715
        %v1084 = vunpack.c.h.b16 %v715
        %v1085 = vunpack.c.l.b16 %v716
        %v1086 = vunpack.c.h.b16 %v716
        %v1087 = vunpack.c.l.b16 %v717
        %v1088 = vunpack.c.h.b16 %v717
        %v1089 = vunpack.c.l.b16 %v718
        %v1090 = vunpack.c.h.b16 %v718
        %v1091 = vunpack.c.l.b16 %v719
        %v1092 = vunpack.c.h.b16 %v719
        %v1093 = vunpack.c.l.b16 %v720
        %v1094 = vunpack.c.h.b16 %v720
        %v1095 = vunpack.c.l.b16 %v721
        %v1096 = vunpack.c.h.b16 %v721
        %v1097 = vunpack.c.l.b16 %v722
        %v1098 = vunpack.c.h.b16 %v722
        %v1099 = vunpack.c.l.b16 %v723
        %v1100 = vunpack.c.h.b16 %v723
        %v1101 = vunpack.c.l.b16 %v724
        %v1102 = vunpack.c.h.b16 %v724
        %v1103 = vunpack.c.l.b16 %v725
        %v1104 = vunpack.c.h.b16 %v725
        %v1105 = vunpack.c.l.b16 %v726
        %v1106 = vunpack.c.h.b16 %v726
        %v1107 = vunpack.c.l.b16 %v727
        %v1108 = vunpack.c.h.b16 %v727
        %v1109 = vunpack.c.l.b16 %v728
        %v1110 = vunpack.c.h.b16 %v728
        %v1111 = vunpack.c.l.b16 %v729
        %v1112 = vunpack.c.h.b16 %v729
        %v1113 = vunpack.c.l.b16 %v730
        %v1114 = vunpack.c.h.b16 %v730
        %v1115 = vunpack.c.l.b16 %v731
        %v1116 = vunpack.c.h.b16 %v731
        %v1117 = vunpack.c.l.b16 %v732
        %v1118 = vunpack.c.h.b16 %v732
        %v1119 = vunpack.c.l.b16 %v733
        %v1120 = vunpack.c.h.b16 %v733
        %v1121 = vunpack.c.l.b16 %v734
        %v1122 = vunpack.c.h.b16 %v734
        %v1123 = vunpack.c.l.b16 %v735
        %v1124 = vunpack.c.h.b16 %v735
        %v1125 = vunpack.c.l.b16 %v736
        %v1126 = vunpack.c.h.b16 %v736
        %v1127 = vunpack.c.l.b16 %v737
        %v1128 = vunpack.c.h.b16 %v737
        %v1129 = vunpack.c.l.b16 %v738
        %v1130 = vunpack.c.h.b16 %v738
        %v1131 = vpack.c.b16 %v1071, %v1067
        %v1132 = vpack.c.b16 %v1072, %v1068
        %v1133 = vpack.c.b16 %v1073, %v1069
        %v1134 = vpack.c.b16 %v1074, %v1070
        %v1135 = vpack.c.b16 %v1079, %v1075
        %v1136 = vpack.c.b16 %v1080, %v1076
        %v1137 = vpack.c.b16 %v1081, %v1077
        %v1138 = vpack.c.b16 %v1082, %v1078
        %v1139 = vpack.c.b16 %v1087, %v1083
        %v1140 = vpack.c.b16 %v1088, %v1084
        %v1141 = vpack.c.b16 %v1089, %v1085
        %v1142 = vpack.c.b16 %v1090, %v1086
        %v1143 = vpack.c.b16 %v1095, %v1091
        %v1144 = vpack.c.b16 %v1096, %v1092
        %v1145 = vpack.c.b16 %v1097, %v1093
        %v1146 = vpack.c.b16 %v1098, %v1094
        %v1147 = vpack.c.b16 %v1103, %v1099
        %v1148 = vpack.c.b16 %v1104, %v1100
        %v1149 = vpack.c.b16 %v1105, %v1101
        %v1150 = vpack.c.b16 %v1106, %v1102
        %v1151 = vpack.c.b16 %v1111, %v1107
        %v1152 = vpack.c.b16 %v1112, %v1108
        %v1153 = vpack.c.b16 %v1113, %v1109
        %v1154 = vpack.c.b16 %v1114, %v1110
        %v1155 = vpack.c.b16 %v1119, %v1115
        %v1156 = vpack.c.b16 %v1120, %v1116
        %v1157 = vpack.c.b16 %v1121, %v1117
        %v1158 = vpack.c.b16 %v1122, %v1118
        %v1159 = vpack.c.b16 %v1127, %v1123
        %v1160 = vpack.c.b16 %v1128, %v1124
        %v1161 = vpack.c.b16 %v1129, %v1125
        %v1162 = vpack.c.b16 %v1130, %v1126
        %1195 = vmatprep.subr.bf16.mxu0 %v1132
        %1196 = vmatpush1.bf16.msra.mxu0 %v1131
        %1197 = vmatprep.subr.bf16.mxu0 %v1136
        %1198 = vmatpush1.bf16.msra.mxu0 %v1135
        %1199 = vmatprep.subr.bf16.mxu0 %v1140
        %1200 = vmatpush1.bf16.msra.mxu0 %v1139
        %1201 = vmatprep.subr.bf16.mxu0 %v1144
        %1202 = vmatpush1.bf16.msra.mxu0 %v1143
        %1203 = vmatprep.subr.bf16.mxu0 %v1148
        %1204 = vmatpush1.bf16.msra.mxu0 %v1147
        %1205 = vmatprep.subr.bf16.mxu0 %v1152
        %1206 = vmatpush1.bf16.msra.mxu0 %v1151
        %1207 = vmatprep.subr.bf16.mxu0 %v1156
        %1208 = vmatpush1.bf16.msra.mxu0 %v1155
        %1209 = vmatprep.subr.bf16.mxu0 %v1160
        %1210 = vmatpush1.bf16.msra.mxu0 %v1159
        %1211 = vmatprep.subr.bf16.mxu0 0
        %1212 = vmatpush1.bf16.msra.mxu0 0
        %1213 = vmatprep.subr.bf16.mxu0 0
        %1214 = vmatpush1.bf16.msra.mxu0 0
        %1215 = vmatprep.subr.bf16.mxu0 0
        %1216 = vmatpush1.bf16.msra.mxu0 0
        %1217 = vmatprep.subr.bf16.mxu0 0
        %1218 = vmatpush1.bf16.msra.mxu0 0
        %1219 = vmatprep.subr.bf16.mxu0 0
        %1220 = vmatpush1.bf16.msra.mxu0 0
        %1221 = vmatprep.subr.bf16.mxu0 0
        %1222 = vmatpush1.bf16.msra.mxu0 0
        %1223 = vmatprep.subr.bf16.mxu0 0
        %1224 = vmatpush1.bf16.msra.mxu0 0
        %1225 = vmatprep.subr.bf16.mxu0 0
        %1226 = vmatpush1.bf16.msra.mxu0 0
        %1227 = vmatprep.mubr.bf16.mxu0 0
        %1228 = vmatmul.mubr.bf16.gmra.mrb[0].mxu0 %v705
        %v1229 = vpop.f32.mrb[0].mxu0
        %v1230 = vadd.f32 %v968, %v1229
        %v1231 = vpop.f32.mrb[0].mxu0
        %v1232 = vadd.f32 %v970, %v1231
        %v1233 = vpop.f32.mrb[0].mxu0
        %v1234 = vadd.f32 %v972, %v1233
        %v1235 = vpop.f32.mrb[0].mxu0
        %v1236 = vadd.f32 %v974, %v1235
        %1237 = vmatprep.mubr.bf16.mxu0 0
        %1238 = vmatmul.mubr.bf16.gmra.mrb[0].mxu0 %v706
        %v1239 = vpop.f32.mrb[0].mxu0
        %v1240 = vadd.f32 %v978, %v1239
        %v1241 = vpop.f32.mrb[0].mxu0
        %v1242 = vadd.f32 %v980, %v1241
        %v1243 = vpop.f32.mrb[0].mxu0
        %v1244 = vpop.f32.mrb[0].mxu0
        %1245 = vdwg.mxu0
        %1246 = vmatprep.subr.bf16.mxu0 %v1134
        %1247 = vmatpush1.bf16.msra.mxu0 %v1133
        %1248 = vmatprep.subr.bf16.mxu0 %v1138
        %1249 = vmatpush1.bf16.msra.mxu0 %v1137
        %1250 = vmatprep.subr.bf16.mxu0 %v1142
        %1251 = vmatpush1.bf16.msra.mxu0 %v1141
        %1252 = vmatprep.subr.bf16.mxu0 %v1146
        %1253 = vmatpush1.bf16.msra.mxu0 %v1145
        %1254 = vmatprep.subr.bf16.mxu0 %v1150
        %1255 = vmatpush1.bf16.msra.mxu0 %v1149
        %1256 = vmatprep.subr.bf16.mxu0 %v1154
        %1257 = vmatpush1.bf16.msra.mxu0 %v1153
        %1258 = vmatprep.subr.bf16.mxu0 %v1158
        %1259 = vmatpush1.bf16.msra.mxu0 %v1157
        %1260 = vmatprep.subr.bf16.mxu0 %v1162
        %1261 = vmatpush1.bf16.msra.mxu0 %v1161
        %1262 = vmatprep.subr.bf16.mxu0 0
        %1263 = vmatpush1.bf16.msra.mxu0 0
        %1264 = vmatprep.subr.bf16.mxu0 0
        %1265 = vmatpush1.bf16.msra.mxu0 0
        %1266 = vmatprep.subr.bf16.mxu0 0
        %1267 = vmatpush1.bf16.msra.mxu0 0
        %1268 = vmatprep.subr.bf16.mxu0 0
        %1269 = vmatpush1.bf16.msra.mxu0 0
        %1270 = vmatprep.subr.bf16.mxu0 0
        %1271 = vmatpush1.bf16.msra.mxu0 0
        %1272 = vmatprep.subr.bf16.mxu0 0
        %1273 = vmatpush1.bf16.msra.mxu0 0
        %1274 = vmatprep.subr.bf16.mxu0 0
        %1275 = vmatpush1.bf16.msra.mxu0 0
        %1276 = vmatprep.subr.bf16.mxu0 0
        %1277 = vmatpush1.bf16.msra.mxu0 0
        %1278 = vmatprep.mubr.bf16.mxu0 0
        %1279 = vmatmul.mubr.bf16.gmra.mrb[0].mxu0 %v705
        %v1280 = vpop.f32.mrb[0].mxu0
        %v1281 = vadd.f32 %v1019, %v1280
        %v1282 = vpop.f32.mrb[0].mxu0
        %v1283 = vadd.f32 %v1021, %v1282
        %v1284 = vpop.f32.mrb[0].mxu0
        %v1285 = vadd.f32 %v1023, %v1284
        %v1286 = vpop.f32.mrb[0].mxu0
        %v1287 = vadd.f32 %v1025, %v1286
        %1288 = vmatprep.mubr.bf16.mxu0 0
        %1289 = vmatmul.mubr.bf16.gmra.mrb[0].mxu0 %v706
        %v1290 = vpop.f32.mrb[0].mxu0
        %v1291 = vadd.f32 %v1029, %v1290
        %v1292 = vpop.f32.mrb[0].mxu0
        %v1293 = vadd.f32 %v1031, %v1292
        %v1294 = vpop.f32.mrb[0].mxu0
        %v1295 = vpop.f32.mrb[0].mxu0
        %1296 = vdwg.mxu0
        %v1297 = vld [vmem:[%s5] sm:$0xf]
        %v1299 = vlaneseq
        %v1300 = vshrl.u32 %v1299, 7
        %v1301 = vsub.s32 0, %v1300
        %v1302 = vrot.slane %v1297, %v1301
        %v1303 = vlaneseq
        %v1304 = vshrl.u32 %v1303, 7
        %v1305 = vsub.s32 1, %v1304
        %v1306 = vrot.slane %v1297, %v1305
        %v1307 = vlaneseq
        %v1308 = vshrl.u32 %v1307, 7
        %v1309 = vsub.s32 2, %v1308
        %v1310 = vrot.slane %v1297, %v1309
        %v1311 = vlaneseq
        %v1312 = vshrl.u32 %v1311, 7
        %v1313 = vsub.s32 3, %v1312
        %v1314 = vrot.slane %v1297, %v1313
        %v1319 = vadd.f32 %v1230, %v1302
        %v1320 = vadd.f32 %v1232, %v1306
        %v1321 = vadd.f32 %v1281, %v1310
        %v1322 = vadd.f32 %v1283, %v1314
        %v1323 = vadd.f32 %v1234, %v1302
        %v1324 = vadd.f32 %v1236, %v1306
        %v1325 = vadd.f32 %v1285, %v1310
        %v1326 = vadd.f32 %v1287, %v1314
        %v1327 = vadd.f32 %v1240, %v1302
        %v1328 = vadd.f32 %v1242, %v1306
        %v1329 = vadd.f32 %v1291, %v1310
        %v1330 = vadd.f32 %v1293, %v1314
        %v1331 = vmul.f32 %v1319, 0.5
        %v1332 = vmul.f32 %v1320, 0.5
        %v1333 = vmul.f32 %v1321, 0.5
        %v1334 = vmul.f32 %v1322, 0.5
        %v1335 = vmul.f32 %v1323, 0.5
        %v1336 = vmul.f32 %v1324, 0.5
        %v1337 = vmul.f32 %v1325, 0.5
        %v1338 = vmul.f32 %v1326, 0.5
        %v1339 = vmul.f32 %v1327, 0.5
        %v1340 = vmul.f32 %v1328, 0.5
        %v1341 = vmul.f32 %v1329, 0.5
        %v1342 = vmul.f32 %v1330, 0.5
        %v1343 = vmul.f32 %v1319, 0.70710677
        %v1344 = vmul.f32 %v1320, 0.70710677
        %v1345 = vmul.f32 %v1321, 0.70710677
        %v1346 = vmul.f32 %v1322, 0.70710677
        %v1347 = vmul.f32 %v1323, 0.70710677
        %v1348 = vmul.f32 %v1324, 0.70710677
        %v1349 = vmul.f32 %v1325, 0.70710677
        %v1350 = vmul.f32 %v1326, 0.70710677
        %v1351 = vmul.f32 %v1327, 0.70710677
        %v1352 = vmul.f32 %v1328, 0.70710677
        %v1353 = vmul.f32 %v1329, 0.70710677
        %v1354 = vmul.f32 %v1330, 0.70710677
        %v1355 = vand.u32 2147483647, %v1343
        %v1356 = vand.u32 2147483647, %v1344
        %v1357 = vand.u32 2147483647, %v1345
        %v1358 = vand.u32 2147483647, %v1346
        %v1359 = vand.u32 2147483647, %v1347
        %v1360 = vand.u32 2147483647, %v1348
        %v1361 = vand.u32 2147483647, %v1349
        %v1362 = vand.u32 2147483647, %v1350
        %v1363 = vand.u32 2147483647, %v1351
        %v1364 = vand.u32 2147483647, %v1352
        %v1365 = vand.u32 2147483647, %v1353
        %v1366 = vand.u32 2147483647, %v1354
        %v1367 = vmul.f32 %v1355, 0.3275911
        %v1368 = vmul.f32 %v1356, 0.3275911
        %v1369 = vmul.f32 %v1357, 0.3275911
        %v1370 = vmul.f32 %v1358, 0.3275911
        %v1371 = vmul.f32 %v1359, 0.3275911
        %v1372 = vmul.f32 %v1360, 0.3275911
        %v1373 = vmul.f32 %v1361, 0.3275911
        %v1374 = vmul.f32 %v1362, 0.3275911
        %v1375 = vmul.f32 %v1363, 0.3275911
        %v1376 = vmul.f32 %v1364, 0.3275911
        %v1377 = vmul.f32 %v1365, 0.3275911
        %v1378 = vmul.f32 %v1366, 0.3275911
        %v1379 = vadd.f32 %v1367, 1.0
        %v1380 = vadd.f32 %v1368, 1.0
        %v1381 = vadd.f32 %v1369, 1.0
        %v1382 = vadd.f32 %v1370, 1.0
        %v1383 = vadd.f32 %v1371, 1.0
        %v1384 = vadd.f32 %v1372, 1.0
        %v1385 = vadd.f32 %v1373, 1.0
        %v1386 = vadd.f32 %v1374, 1.0
        %v1387 = vadd.f32 %v1375, 1.0
        %v1388 = vadd.f32 %v1376, 1.0
        %v1389 = vadd.f32 %v1377, 1.0
        %v1390 = vadd.f32 %v1378, 1.0
        %v1391 = vrcp.pop %v1379
        %v1392 = vmul.f32 1.0, %v1391
        %v1393 = vrcp.pop %v1380
        %v1394 = vmul.f32 1.0, %v1393
        %v1395 = vrcp.pop %v1381
        %v1396 = vmul.f32 1.0, %v1395
        %v1397 = vrcp.pop %v1382
        %v1398 = vmul.f32 1.0, %v1397
        %v1399 = vrcp.pop %v1383
        %v1400 = vmul.f32 1.0, %v1399
        %v1401 = vrcp.pop %v1384
        %v1402 = vmul.f32 1.0, %v1401
        %v1403 = vrcp.pop %v1385
        %v1404 = vmul.f32 1.0, %v1403
        %v1405 = vrcp.pop %v1386
        %v1406 = vmul.f32 1.0, %v1405
        %v1407 = vrcp.pop %v1387
        %v1408 = vmul.f32 1.0, %v1407
        %v1409 = vrcp.pop %v1388
        %v1410 = vmul.f32 1.0, %v1409
        %v1411 = vrcp.pop %v1389
        %v1412 = vmul.f32 1.0, %v1411
        %v1413 = vrcp.pop %v1390
        %v1414 = vmul.f32 1.0, %v1413
        %v1415 = vmul.f32 %v1392, 1.0614054
        %v1416 = vmul.f32 %v1394, 1.0614054
        %v1417 = vmul.f32 %v1396, 1.0614054
        %v1418 = vmul.f32 %v1398, 1.0614054
        %v1419 = vmul.f32 %v1400, 1.0614054
        %v1420 = vmul.f32 %v1402, 1.0614054
        %v1421 = vmul.f32 %v1404, 1.0614054
        %v1422 = vmul.f32 %v1406, 1.0614054
        %v1423 = vmul.f32 %v1408, 1.0614054
        %v1424 = vmul.f32 %v1410, 1.0614054
        %v1425 = vmul.f32 %v1412, 1.0614054
        %v1426 = vmul.f32 %v1414, 1.0614054
        %v1427 = vadd.f32 %v1415, -1.4531521
        %v1428 = vadd.f32 %v1416, -1.4531521
        %v1429 = vadd.f32 %v1417, -1.4531521
        %v1430 = vadd.f32 %v1418, -1.4531521
        %v1431 = vadd.f32 %v1419, -1.4531521
        %v1432 = vadd.f32 %v1420, -1.4531521
        %v1433 = vadd.f32 %v1421, -1.4531521
        %v1434 = vadd.f32 %v1422, -1.4531521
        %v1435 = vadd.f32 %v1423, -1.4531521
        %v1436 = vadd.f32 %v1424, -1.4531521
        %v1437 = vadd.f32 %v1425, -1.4531521
        %v1438 = vadd.f32 %v1426, -1.4531521
        %v1439 = vmul.f32 %v1427, %v1392
        %v1440 = vmul.f32 %v1428, %v1394
        %v1441 = vmul.f32 %v1429, %v1396
        %v1442 = vmul.f32 %v1430, %v1398
        %v1443 = vmul.f32 %v1431, %v1400
        %v1444 = vmul.f32 %v1432, %v1402
        %v1445 = vmul.f32 %v1433, %v1404
        %v1446 = vmul.f32 %v1434, %v1406
        %v1447 = vmul.f32 %v1435, %v1408
        %v1448 = vmul.f32 %v1436, %v1410
        %v1449 = vmul.f32 %v1437, %v1412
        %v1450 = vmul.f32 %v1438, %v1414
        %v1451 = vadd.f32 %v1439, 1.4214138
        %v1452 = vadd.f32 %v1440, 1.4214138
        %v1453 = vadd.f32 %v1441, 1.4214138
        %v1454 = vadd.f32 %v1442, 1.4214138
        %v1455 = vadd.f32 %v1443, 1.4214138
        %v1456 = vadd.f32 %v1444, 1.4214138
        %v1457 = vadd.f32 %v1445, 1.4214138
        %v1458 = vadd.f32 %v1446, 1.4214138
        %v1459 = vadd.f32 %v1447, 1.4214138
        %v1460 = vadd.f32 %v1448, 1.4214138
        %v1461 = vadd.f32 %v1449, 1.4214138
        %v1462 = vadd.f32 %v1450, 1.4214138
        %v1463 = vmul.f32 %v1451, %v1392
        %v1464 = vmul.f32 %v1452, %v1394
        %v1465 = vmul.f32 %v1453, %v1396
        %v1466 = vmul.f32 %v1454, %v1398
        %v1467 = vmul.f32 %v1455, %v1400
        %v1468 = vmul.f32 %v1456, %v1402
        %v1469 = vmul.f32 %v1457, %v1404
        %v1470 = vmul.f32 %v1458, %v1406
        %v1471 = vmul.f32 %v1459, %v1408
        %v1472 = vmul.f32 %v1460, %v1410
        %v1473 = vmul.f32 %v1461, %v1412
        %v1474 = vmul.f32 %v1462, %v1414
        %v1475 = vadd.f32 %v1463, -0.28449672
        %v1476 = vadd.f32 %v1464, -0.28449672
        %v1477 = vadd.f32 %v1465, -0.28449672
        %v1478 = vadd.f32 %v1466, -0.28449672
        %v1479 = vadd.f32 %v1467, -0.28449672
        %v1480 = vadd.f32 %v1468, -0.28449672
        %v1481 = vadd.f32 %v1469, -0.28449672
        %v1482 = vadd.f32 %v1470, -0.28449672
        %v1483 = vadd.f32 %v1471, -0.28449672
        %v1484 = vadd.f32 %v1472, -0.28449672
        %v1485 = vadd.f32 %v1473, -0.28449672
        %v1486 = vadd.f32 %v1474, -0.28449672
        %v1487 = vmul.f32 %v1475, %v1392
        %v1488 = vmul.f32 %v1476, %v1394
        %v1489 = vmul.f32 %v1477, %v1396
        %v1490 = vmul.f32 %v1478, %v1398
        %v1491 = vmul.f32 %v1479, %v1400
        %v1492 = vmul.f32 %v1480, %v1402
        %v1493 = vmul.f32 %v1481, %v1404
        %v1494 = vmul.f32 %v1482, %v1406
        %v1495 = vmul.f32 %v1483, %v1408
        %v1496 = vmul.f32 %v1484, %v1410
        %v1497 = vmul.f32 %v1485, %v1412
        %v1498 = vmul.f32 %v1486, %v1414
        %v1499 = vadd.f32 %v1487, 0.2548296
        %v1500 = vadd.f32 %v1488, 0.2548296
        %v1501 = vadd.f32 %v1489, 0.2548296
        %v1502 = vadd.f32 %v1490, 0.2548296
        %v1503 = vadd.f32 %v1491, 0.2548296
        %v1504 = vadd.f32 %v1492, 0.2548296
        %v1505 = vadd.f32 %v1493, 0.2548296
        %v1506 = vadd.f32 %v1494, 0.2548296
        %v1507 = vadd.f32 %v1495, 0.2548296
        %v1508 = vadd.f32 %v1496, 0.2548296
        %v1509 = vadd.f32 %v1497, 0.2548296
        %v1510 = vadd.f32 %v1498, 0.2548296
        %v1511 = vmul.f32 %v1499, %v1392
        %v1512 = vmul.f32 %v1500, %v1394
        %v1513 = vmul.f32 %v1501, %v1396
        %v1514 = vmul.f32 %v1502, %v1398
        %v1515 = vmul.f32 %v1503, %v1400
        %v1516 = vmul.f32 %v1504, %v1402
        %v1517 = vmul.f32 %v1505, %v1404
        %v1518 = vmul.f32 %v1506, %v1406
        %v1519 = vmul.f32 %v1507, %v1408
        %v1520 = vmul.f32 %v1508, %v1410
        %v1521 = vmul.f32 %v1509, %v1412
        %v1522 = vmul.f32 %v1510, %v1414
        %v1523 = vsub.f32 0.0, %v1355
        %v1524 = vsub.f32 0.0, %v1356
        %v1525 = vsub.f32 0.0, %v1357
        %v1526 = vsub.f32 0.0, %v1358
        %v1527 = vsub.f32 0.0, %v1359
        %v1528 = vsub.f32 0.0, %v1360
        %v1529 = vsub.f32 0.0, %v1361
        %v1530 = vsub.f32 0.0, %v1362
        %v1531 = vsub.f32 0.0, %v1363
        %v1532 = vsub.f32 0.0, %v1364
        %v1533 = vsub.f32 0.0, %v1365
        %v1534 = vsub.f32 0.0, %v1366
        %v1535 = vmul.f32 %v1523, %v1355
        %v1536 = vmul.f32 %v1524, %v1356
        %v1537 = vmul.f32 %v1525, %v1357
        %v1538 = vmul.f32 %v1526, %v1358
        %v1539 = vmul.f32 %v1527, %v1359
        %v1540 = vmul.f32 %v1528, %v1360
        %v1541 = vmul.f32 %v1529, %v1361
        %v1542 = vmul.f32 %v1530, %v1362
        %v1543 = vmul.f32 %v1531, %v1363
        %v1544 = vmul.f32 %v1532, %v1364
        %v1545 = vmul.f32 %v1533, %v1365
        %v1546 = vmul.f32 %v1534, %v1366
        %v1547 = vmul.f32 %v1535, 1.442695
        %v1548 = vpow.pop %v1547
        %v1549 = vmul.f32 %v1536, 1.442695
        %v1550 = vpow.pop %v1549
        %v1551 = vmul.f32 %v1537, 1.442695
        %v1552 = vpow.pop %v1551
        %v1553 = vmul.f32 %v1538, 1.442695
        %v1554 = vpow.pop %v1553
        %v1555 = vmul.f32 %v1539, 1.442695
        %v1556 = vpow.pop %v1555
        %v1557 = vmul.f32 %v1540, 1.442695
        %v1558 = vpow.pop %v1557
        %v1559 = vmul.f32 %v1541, 1.442695
        %v1560 = vpow.pop %v1559
        %v1561 = vmul.f32 %v1542, 1.442695
        %v1562 = vpow.pop %v1561
        %v1563 = vmul.f32 %v1543, 1.442695
        %v1564 = vpow.pop %v1563
        %v1565 = vmul.f32 %v1544, 1.442695
        %v1566 = vpow.pop %v1565
        %v1567 = vmul.f32 %v1545, 1.442695
        %v1568 = vpow.pop %v1567
        %v1569 = vmul.f32 %v1546, 1.442695
        %v1570 = vpow.pop %v1569
        %v1571 = vmul.f32 %v1511, %v1548
        %v1572 = vmul.f32 %v1512, %v1550
        %v1573 = vmul.f32 %v1513, %v1552
        %v1574 = vmul.f32 %v1514, %v1554
        %v1575 = vmul.f32 %v1515, %v1556
        %v1576 = vmul.f32 %v1516, %v1558
        %v1577 = vmul.f32 %v1517, %v1560
        %v1578 = vmul.f32 %v1518, %v1562
        %v1579 = vmul.f32 %v1519, %v1564
        %v1580 = vmul.f32 %v1520, %v1566
        %v1581 = vmul.f32 %v1521, %v1568
        %v1582 = vmul.f32 %v1522, %v1570
        %v1583 = vsub.f32 1.0, %v1571
        %v1584 = vsub.f32 1.0, %v1572
        %v1585 = vsub.f32 1.0, %v1573
        %v1586 = vsub.f32 1.0, %v1574
        %v1587 = vsub.f32 1.0, %v1575
        %v1588 = vsub.f32 1.0, %v1576
        %v1589 = vsub.f32 1.0, %v1577
        %v1590 = vsub.f32 1.0, %v1578
        %v1591 = vsub.f32 1.0, %v1579
        %v1592 = vsub.f32 1.0, %v1580
        %v1593 = vsub.f32 1.0, %v1581
        %v1594 = vsub.f32 1.0, %v1582
        %vm1595 = vcmp.ge.f32.partialorder %v1343, 0.0
        %vm1596 = vcmp.ge.f32.partialorder %v1344, 0.0
        %vm1597 = vcmp.ge.f32.partialorder %v1345, 0.0
        %vm1598 = vcmp.ge.f32.partialorder %v1346, 0.0
        %vm1599 = vcmp.ge.f32.partialorder %v1347, 0.0
        %vm1600 = vcmp.ge.f32.partialorder %v1348, 0.0
        %vm1601 = vcmp.ge.f32.partialorder %v1349, 0.0
        %vm1602 = vcmp.ge.f32.partialorder %v1350, 0.0
        %vm1603 = vcmp.ge.f32.partialorder %v1351, 0.0
        %vm1604 = vcmp.ge.f32.partialorder %v1352, 0.0
        %vm1605 = vcmp.ge.f32.partialorder %v1353, 0.0
        %vm1606 = vcmp.ge.f32.partialorder %v1354, 0.0
        %v1607 = vsub.f32 0.0, %v1583
        %v1608 = vsub.f32 0.0, %v1584
        %v1609 = vsub.f32 0.0, %v1585
        %v1610 = vsub.f32 0.0, %v1586
        %v1611 = vsub.f32 0.0, %v1587
        %v1612 = vsub.f32 0.0, %v1588
        %v1613 = vsub.f32 0.0, %v1589
        %v1614 = vsub.f32 0.0, %v1590
        %v1615 = vsub.f32 0.0, %v1591
        %v1616 = vsub.f32 0.0, %v1592
        %v1617 = vsub.f32 0.0, %v1593
        %v1618 = vsub.f32 0.0, %v1594
        %v1619 = vsel %vm1595, %v1583, %v1607
        %v1620 = vsel %vm1596, %v1584, %v1608
        %v1621 = vsel %vm1597, %v1585, %v1609
        %v1622 = vsel %vm1598, %v1586, %v1610
        %v1623 = vsel %vm1599, %v1587, %v1611
        %v1624 = vsel %vm1600, %v1588, %v1612
        %v1625 = vsel %vm1601, %v1589, %v1613
        %v1626 = vsel %vm1602, %v1590, %v1614
        %v1627 = vsel %vm1603, %v1591, %v1615
        %v1628 = vsel %vm1604, %v1592, %v1616
        %v1629 = vsel %vm1605, %v1593, %v1617
        %v1630 = vsel %vm1606, %v1594, %v1618
        %v1631 = vadd.f32 %v1619, 1.0
        %v1632 = vadd.f32 %v1620, 1.0
        %v1633 = vadd.f32 %v1621, 1.0
        %v1634 = vadd.f32 %v1622, 1.0
        %v1635 = vadd.f32 %v1623, 1.0
        %v1636 = vadd.f32 %v1624, 1.0
        %v1637 = vadd.f32 %v1625, 1.0
        %v1638 = vadd.f32 %v1626, 1.0
        %v1639 = vadd.f32 %v1627, 1.0
        %v1640 = vadd.f32 %v1628, 1.0
        %v1641 = vadd.f32 %v1629, 1.0
        %v1642 = vadd.f32 %v1630, 1.0
        %v1643 = vmul.f32 %v1331, %v1631
        %v1644 = vmul.f32 %v1332, %v1632
        %v1645 = vmul.f32 %v1333, %v1633
        %v1646 = vmul.f32 %v1334, %v1634
        %v1647 = vmul.f32 %v1335, %v1635
        %v1648 = vmul.f32 %v1336, %v1636
        %v1649 = vmul.f32 %v1337, %v1637
        %v1650 = vmul.f32 %v1338, %v1638
        %v1651 = vmul.f32 %v1339, %v1639
        %v1652 = vmul.f32 %v1340, %v1640
        %v1653 = vmul.f32 %v1341, %v1641
        %v1654 = vmul.f32 %v1342, %v1642
        %v1655 = vpack.c.bf16 %v1647, %v1643
        %v1656 = vpack.c.bf16 %v1648, %v1644
        %v1657 = vpack.c.bf16 %v1649, %v1645
        %v1658 = vpack.c.bf16 %v1650, %v1646
        %v1659 = vpack.c.bf16 %v1651, %v1651
        %v1660 = vpack.c.bf16 %v1652, %v1652
        %v1661 = vpack.c.bf16 %v1653, %v1653
        %v1662 = vpack.c.bf16 %v1654, %v1654
        %v1663 = vld [vmem:[#allocation12] sm:$0xf]
        %v1664 = vld [vmem:[#allocation12 + $0x4] sm:$0xf]
        %v1665 = vld [vmem:[#allocation12 + $0x8] sm:$0xf]
        %v1666 = vld [vmem:[#allocation12 + $0xc] sm:$0xf]
        %v1667 = vld [vmem:[#allocation12 + $0x10] sm:$0xf]
        %v1668 = vld [vmem:[#allocation12 + $0x14] sm:$0xf]
        %v1669 = vld [vmem:[#allocation12 + $0x18] sm:$0xf]
        %v1670 = vld [vmem:[#allocation12 + $0x1c] sm:$0xf]
        %v1671 = vld [vmem:[#allocation12 + $0x20] sm:$0xf]
        %v1672 = vld [vmem:[#allocation12 + $0x24] sm:$0xf]
        %v1673 = vld [vmem:[#allocation12 + $0x28] sm:$0xf]
        %v1674 = vld [vmem:[#allocation12 + $0x2c] sm:$0xf]
        %v1675 = vld [vmem:[#allocation12 + $0x30] sm:$0xf]
        %v1676 = vld [vmem:[#allocation12 + $0x34] sm:$0xf]
        %v1677 = vld [vmem:[#allocation12 + $0x38] sm:$0xf]
        %v1678 = vld [vmem:[#allocation12 + $0x3c] sm:$0xf]
        %v1679 = vld [vmem:[#allocation12 + $0x40] sm:$0xf]
        %v1680 = vld [vmem:[#allocation12 + $0x44] sm:$0xf]
        %v1681 = vld [vmem:[#allocation12 + $0x48] sm:$0xf]
        %v1682 = vld [vmem:[#allocation12 + $0x4c] sm:$0xf]
        %v1683 = vld [vmem:[#allocation12 + $0x50] sm:$0xf]
        %v1684 = vld [vmem:[#allocation12 + $0x54] sm:$0xf]
        %v1685 = vld [vmem:[#allocation12 + $0x58] sm:$0xf]
        %v1686 = vld [vmem:[#allocation12 + $0x5c] sm:$0xf]
        %v1687 = vld [vmem:[#allocation12 + $0x60] sm:$0xf]
        %v1688 = vld [vmem:[#allocation12 + $0x64] sm:$0xf]
        %v1689 = vld [vmem:[#allocation12 + $0x68] sm:$0xf]
        %v1690 = vld [vmem:[#allocation12 + $0x6c] sm:$0xf]
        %v1691 = vld [vmem:[#allocation12 + $0x70] sm:$0xf]
        %v1692 = vld [vmem:[#allocation12 + $0x74] sm:$0xf]
        %v1693 = vld [vmem:[#allocation12 + $0x78] sm:$0xf]
        %v1694 = vld [vmem:[#allocation12 + $0x7c] sm:$0xf]
        %v1695 = vld [vmem:[#allocation12 + $0x80] sm:$0xf]
        %v1696 = vld [vmem:[#allocation12 + $0x84] sm:$0xf]
        %v1697 = vld [vmem:[#allocation12 + $0x88] sm:$0xf]
        %v1698 = vld [vmem:[#allocation12 + $0x8c] sm:$0xf]
        %v1699 = vld [vmem:[#allocation12 + $0x90] sm:$0xf]
        %v1700 = vld [vmem:[#allocation12 + $0x94] sm:$0xf]
        %v1701 = vld [vmem:[#allocation12 + $0x98] sm:$0xf]
        %v1702 = vld [vmem:[#allocation12 + $0x9c] sm:$0xf]
        %v1703 = vld [vmem:[#allocation12 + $0xa0] sm:$0xf]
        %v1704 = vld [vmem:[#allocation12 + $0xa4] sm:$0xf]
        %v1705 = vld [vmem:[#allocation12 + $0xa8] sm:$0xf]
        %v1706 = vld [vmem:[#allocation12 + $0xac] sm:$0xf]
        %v1707 = vld [vmem:[#allocation12 + $0xb0] sm:$0xf]
        %v1708 = vld [vmem:[#allocation12 + $0xb4] sm:$0xf]
        %v1709 = vld [vmem:[#allocation12 + $0xb8] sm:$0xf]
        %v1710 = vld [vmem:[#allocation12 + $0xbc] sm:$0xf]
        %v1711 = vld [vmem:[#allocation12 + $0xc0] sm:$0xf]
        %v1712 = vld [vmem:[#allocation12 + $0xc4] sm:$0xf]
        %v1713 = vld [vmem:[#allocation12 + $0xc8] sm:$0xf]
        %v1714 = vld [vmem:[#allocation12 + $0xcc] sm:$0xf]
        %v1715 = vld [vmem:[#allocation12 + $0xd0] sm:$0xf]
        %v1716 = vld [vmem:[#allocation12 + $0xd4] sm:$0xf]
        %v1717 = vld [vmem:[#allocation12 + $0xd8] sm:$0xf]
        %v1718 = vld [vmem:[#allocation12 + $0xdc] sm:$0xf]
        %v1719 = vld [vmem:[#allocation12 + $0xe0] sm:$0xf]
        %v1720 = vld [vmem:[#allocation12 + $0xe4] sm:$0xf]
        %v1721 = vld [vmem:[#allocation12 + $0xe8] sm:$0xf]
        %v1722 = vld [vmem:[#allocation12 + $0xec] sm:$0xf]
        %v1723 = vld [vmem:[#allocation12 + $0xf0] sm:$0xf]
        %v1724 = vld [vmem:[#allocation12 + $0xf4] sm:$0xf]
        %v1725 = vld [vmem:[#allocation12 + $0xf8] sm:$0xf]
        %v1726 = vld [vmem:[#allocation12 + $0xfc] sm:$0xf]
        %v1727 = vld [vmem:[%s7] sm:$0x1]
        %v1729 = vlaneseq
        %v1730 = vshrl.u32 %v1729, 7
        %v1731 = vsub.s32 0, %v1730
        %v1732 = vrot.slane %v1727, %v1731
        %v1798 = vunpack.c.l.b16 %v1663
        %v1799 = vunpack.c.l.b16 %v1664
        %v1800 = vunpack.c.l.b16 %v1665
        %v1801 = vunpack.c.l.b16 %v1666
        %v1802 = vunpack.c.l.b16 %v1667
        %v1803 = vunpack.c.l.b16 %v1668
        %v1804 = vunpack.c.l.b16 %v1669
        %v1805 = vunpack.c.l.b16 %v1670
        %v1806 = vunpack.c.l.b16 %v1671
        %v1807 = vunpack.c.l.b16 %v1672
        %v1808 = vunpack.c.l.b16 %v1673
        %v1809 = vunpack.c.l.b16 %v1674
        %v1810 = vunpack.c.l.b16 %v1675
        %v1811 = vunpack.c.l.b16 %v1676
        %v1812 = vunpack.c.l.b16 %v1677
        %v1813 = vunpack.c.l.b16 %v1678
        %v1814 = vunpack.c.l.b16 %v1679
        %v1815 = vunpack.c.l.b16 %v1680
        %v1816 = vunpack.c.l.b16 %v1681
        %v1817 = vunpack.c.l.b16 %v1682
        %v1818 = vunpack.c.l.b16 %v1683
        %v1819 = vunpack.c.l.b16 %v1684
        %v1820 = vunpack.c.l.b16 %v1685
        %v1821 = vunpack.c.l.b16 %v1686
        %v1822 = vunpack.c.l.b16 %v1687
        %v1823 = vunpack.c.l.b16 %v1688
        %v1824 = vunpack.c.l.b16 %v1689
        %v1825 = vunpack.c.l.b16 %v1690
        %v1826 = vunpack.c.l.b16 %v1691
        %v1827 = vunpack.c.l.b16 %v1692
        %v1828 = vunpack.c.l.b16 %v1693
        %v1829 = vunpack.c.l.b16 %v1694
        %v1830 = vunpack.c.l.b16 %v1695
        %v1831 = vunpack.c.l.b16 %v1696
        %v1832 = vunpack.c.l.b16 %v1697
        %v1833 = vunpack.c.l.b16 %v1698
        %v1834 = vunpack.c.l.b16 %v1699
        %v1835 = vunpack.c.l.b16 %v1700
        %v1836 = vunpack.c.l.b16 %v1701
        %v1837 = vunpack.c.l.b16 %v1702
        %v1838 = vunpack.c.l.b16 %v1703
        %v1839 = vunpack.c.l.b16 %v1704
        %v1840 = vunpack.c.l.b16 %v1705
        %v1841 = vunpack.c.l.b16 %v1706
        %v1842 = vunpack.c.l.b16 %v1707
        %v1843 = vunpack.c.l.b16 %v1708
        %v1844 = vunpack.c.l.b16 %v1709
        %v1845 = vunpack.c.l.b16 %v1710
        %v1846 = vunpack.c.l.b16 %v1711
        %v1847 = vunpack.c.l.b16 %v1712
        %v1848 = vunpack.c.l.b16 %v1713
        %v1849 = vunpack.c.l.b16 %v1714
        %v1850 = vunpack.c.l.b16 %v1715
        %v1851 = vunpack.c.l.b16 %v1716
        %v1852 = vunpack.c.l.b16 %v1717
        %v1853 = vunpack.c.l.b16 %v1718
        %v1854 = vunpack.c.l.b16 %v1719
        %v1855 = vunpack.c.l.b16 %v1720
        %v1856 = vunpack.c.l.b16 %v1721
        %v1857 = vunpack.c.l.b16 %v1722
        %v1858 = vunpack.c.l.b16 %v1723
        %v1859 = vunpack.c.l.b16 %v1724
        %v1860 = vunpack.c.l.b16 %v1725
        %v1861 = vunpack.c.l.b16 %v1726
        %v1862 = vpack.c.b16 %v1799, %v1798
        %v1863 = vpack.c.b16 %v1801, %v1800
        %v1864 = vpack.c.b16 %v1803, %v1802
        %v1865 = vpack.c.b16 %v1805, %v1804
        %v1866 = vpack.c.b16 %v1807, %v1806
        %v1867 = vpack.c.b16 %v1809, %v1808
        %v1868 = vpack.c.b16 %v1811, %v1810
        %v1869 = vpack.c.b16 %v1813, %v1812
        %v1870 = vpack.c.b16 %v1815, %v1814
        %v1871 = vpack.c.b16 %v1817, %v1816
        %v1872 = vpack.c.b16 %v1819, %v1818
        %v1873 = vpack.c.b16 %v1821, %v1820
        %v1874 = vpack.c.b16 %v1823, %v1822
        %v1875 = vpack.c.b16 %v1825, %v1824
        %v1876 = vpack.c.b16 %v1827, %v1826
        %v1877 = vpack.c.b16 %v1829, %v1828
        %v1878 = vpack.c.b16 %v1831, %v1830
        %v1879 = vpack.c.b16 %v1833, %v1832
        %v1880 = vpack.c.b16 %v1835, %v1834
        %v1881 = vpack.c.b16 %v1837, %v1836
        %v1882 = vpack.c.b16 %v1839, %v1838
        %v1883 = vpack.c.b16 %v1841, %v1840
        %v1884 = vpack.c.b16 %v1843, %v1842
        %v1885 = vpack.c.b16 %v1845, %v1844
        %v1886 = vpack.c.b16 %v1847, %v1846
        %v1887 = vpack.c.b16 %v1849, %v1848
        %v1888 = vpack.c.b16 %v1851, %v1850
        %v1889 = vpack.c.b16 %v1853, %v1852
        %v1890 = vpack.c.b16 %v1855, %v1854
        %v1891 = vpack.c.b16 %v1857, %v1856
        %v1892 = vpack.c.b16 %v1859, %v1858
        %v1893 = vpack.c.b16 %v1861, %v1860
        %1926 = vmatprep.subr.bf16.mxu0 0
        %1927 = vmatpush1.bf16.msra.mxu0 %v1862
        %1928 = vmatprep.subr.bf16.mxu0 0
        %1929 = vmatpush1.bf16.msra.mxu0 %v1863
        %1930 = vmatprep.subr.bf16.mxu0 0
        %1931 = vmatpush1.bf16.msra.mxu0 %v1864
        %1932 = vmatprep.subr.bf16.mxu0 0
        %1933 = vmatpush1.bf16.msra.mxu0 %v1865
        %1934 = vmatprep.subr.bf16.mxu0 0
        %1935 = vmatpush1.bf16.msra.mxu0 %v1866
        %1936 = vmatprep.subr.bf16.mxu0 0
        %1937 = vmatpush1.bf16.msra.mxu0 %v1867
        %1938 = vmatprep.subr.bf16.mxu0 0
        %1939 = vmatpush1.bf16.msra.mxu0 %v1868
        %1940 = vmatprep.subr.bf16.mxu0 0
        %1941 = vmatpush1.bf16.msra.mxu0 %v1869
        %1942 = vmatprep.subr.bf16.mxu0 0
        %1943 = vmatpush1.bf16.msra.mxu0 %v1870
        %1944 = vmatprep.subr.bf16.mxu0 0
        %1945 = vmatpush1.bf16.msra.mxu0 %v1871
        %1946 = vmatprep.subr.bf16.mxu0 0
        %1947 = vmatpush1.bf16.msra.mxu0 %v1872
        %1948 = vmatprep.subr.bf16.mxu0 0
        %1949 = vmatpush1.bf16.msra.mxu0 %v1873
        %1950 = vmatprep.subr.bf16.mxu0 0
        %1951 = vmatpush1.bf16.msra.mxu0 %v1874
        %1952 = vmatprep.subr.bf16.mxu0 0
        %1953 = vmatpush1.bf16.msra.mxu0 %v1875
        %1954 = vmatprep.subr.bf16.mxu0 0
        %1955 = vmatpush1.bf16.msra.mxu0 %v1876
        %1956 = vmatprep.subr.bf16.mxu0 0
        %1957 = vmatpush1.bf16.msra.mxu0 %v1877
        %1958 = vmatprep.mubr.bf16.mxu0 %v1656
        %1959 = vmatmul.mubr.bf16.gmra.mrb[0].mxu0 %v1655
        %v1960 = vpop.f32.mrb[0].mxu0
        %v1961 = vadd.f32 %v1732, %v1960
        %v1962 = vpop.f32.mrb[0].mxu0
        %v1963 = vpop.f32.mrb[0].mxu0
        %v1964 = vadd.f32 %v1732, %v1963
        %v1965 = vpop.f32.mrb[0].mxu0
        %1966 = vmatprep.mubr.bf16.mxu0 %v1660
        %1967 = vmatmul.mubr.bf16.gmra.mrb[0].mxu0 %v1659
        %v1968 = vpop.f32.mrb[0].mxu0
        %v1969 = vadd.f32 %v1732, %v1968
        %v1970 = vpop.f32.mrb[0].mxu0
        %v1971 = vpop.f32.mrb[0].mxu0
        %v1972 = vpop.f32.mrb[0].mxu0
        %1973 = vdwg.mxu0
        %1974 = vmatprep.subr.bf16.mxu0 0
        %1975 = vmatpush1.bf16.msra.mxu0 %v1878
        %1976 = vmatprep.subr.bf16.mxu0 0
        %1977 = vmatpush1.bf16.msra.mxu0 %v1879
        %1978 = vmatprep.subr.bf16.mxu0 0
        %1979 = vmatpush1.bf16.msra.mxu0 %v1880
        %1980 = vmatprep.subr.bf16.mxu0 0
        %1981 = vmatpush1.bf16.msra.mxu0 %v1881
        %1982 = vmatprep.subr.bf16.mxu0 0
        %1983 = vmatpush1.bf16.msra.mxu0 %v1882
        %1984 = vmatprep.subr.bf16.mxu0 0
        %1985 = vmatpush1.bf16.msra.mxu0 %v1883
        %1986 = vmatprep.subr.bf16.mxu0 0
        %1987 = vmatpush1.bf16.msra.mxu0 %v1884
        %1988 = vmatprep.subr.bf16.mxu0 0
        %1989 = vmatpush1.bf16.msra.mxu0 %v1885
        %1990 = vmatprep.subr.bf16.mxu0 0
        %1991 = vmatpush1.bf16.msra.mxu0 %v1886
        %1992 = vmatprep.subr.bf16.mxu0 0
        %1993 = vmatpush1.bf16.msra.mxu0 %v1887
        %1994 = vmatprep.subr.bf16.mxu0 0
        %1995 = vmatpush1.bf16.msra.mxu0 %v1888
        %1996 = vmatprep.subr.bf16.mxu0 0
        %1997 = vmatpush1.bf16.msra.mxu0 %v1889
        %1998 = vmatprep.subr.bf16.mxu0 0
        %1999 = vmatpush1.bf16.msra.mxu0 %v1890
        %2000 = vmatprep.subr.bf16.mxu0 0
        %2001 = vmatpush1.bf16.msra.mxu0 %v1891
        %2002 = vmatprep.subr.bf16.mxu0 0
        %2003 = vmatpush1.bf16.msra.mxu0 %v1892
        %2004 = vmatprep.subr.bf16.mxu0 0
        %2005 = vmatpush1.bf16.msra.mxu0 %v1893
        %2006 = vmatprep.mubr.bf16.mxu0 %v1658
        %2007 = vmatmul.mubr.bf16.gmra.mrb[0].mxu0 %v1657
        %v2008 = vpop.f32.mrb[0].mxu0
        %v2009 = vadd.f32 %v1961, %v2008
        %v2010 = vpop.f32.mrb[0].mxu0
        %v2011 = vpop.f32.mrb[0].mxu0
        %v2012 = vadd.f32 %v1964, %v2011
        %v2013 = vpop.f32.mrb[0].mxu0
        %2014 = vmatprep.mubr.bf16.mxu0 %v1662
        %2015 = vmatmul.mubr.bf16.gmra.mrb[0].mxu0 %v1661
        %v2016 = vpop.f32.mrb[0].mxu0
        %v2017 = vadd.f32 %v1969, %v2016
        %v2018 = vpop.f32.mrb[0].mxu0
        %v2019 = vpop.f32.mrb[0].mxu0
        %v2020 = vpop.f32.mrb[0].mxu0
        %2021 = vdwg.mxu0
        %v2022 = vld [vmem:[#allocation2] sm:$0x1]
        %v2023 = vtanh.pop %v2022
        %v2025 = vlaneseq
        %v2026 = vshrl.u32 %v2025, 7
        %v2027 = vsub.s32 0, %v2026
        %v2028 = vrot.slane %v2023, %v2027
        %2029 = vset.pattern.permute.xlu0 0
        %2030 = vperm.xlu0 %2029, %v2028
        %v2031 = vpop.permute.xlu0 %2030
        %v2033 = vmul.f32 %v2031, %v2009
        %v2034 = vmul.f32 %v2031, %v2012
        %v2035 = vmul.f32 %v2031, %v2017
        %v2036 = vadd.f32 %v506, %v2033
        %v2037 = vadd.f32 %v507, %v2034
        %v2038 = vadd.f32 %v508, %v2035
        %2039 = vadd.xlane.f32.xlu0 %v2036
        %v2040 = vpop.xlane.xlu0 %2039
        %2041 = vadd.xlane.f32.xlu0 %v2037
        %v2042 = vpop.xlane.xlu0 %2041
        %2043 = vadd.xlane.f32.xlu0 %v2038
        %v2044 = vpop.xlane.xlu0 %2043
        %v2045 = vrcp.pop 128.0
        %v2046 = vmul.f32 %v2040, %v2045
        %v2047 = vmul.f32 %v2042, %v2045
        %v2048 = vmul.f32 %v2044, %v2045
        %v2049 = vsub.f32 %v2036, %v2046
        %v2050 = vsub.f32 %v2037, %v2047
        %v2051 = vsub.f32 %v2038, %v2048
        %v2052 = vmul.f32 %v2049, %v2049
        %v2053 = vmul.f32 %v2050, %v2050
        %v2054 = vmul.f32 %v2051, %v2051
        %2055 = vadd.xlane.f32.xlu0 %v2052
        %v2056 = vpop.xlane.xlu0 %2055
        %2057 = vadd.xlane.f32.xlu0 %v2053
        %v2058 = vpop.xlane.xlu0 %2057
        %2059 = vadd.xlane.f32.xlu0 %v2054
        %v2060 = vpop.xlane.xlu0 %2059
        %v2061 = vmul.f32 %v2056, %v2045
        %v2062 = vmul.f32 %v2058, %v2045
        %v2063 = vmul.f32 %v2060, %v2045
        %v2064 = vadd.f32 %v2061, 1e-05
        %v2065 = vadd.f32 %v2062, 1e-05
        %v2066 = vadd.f32 %v2063, 1e-05
        %v2067 = vrsqrt.pop %v2064
        %v2068 = vrsqrt.pop %v2065
        %v2069 = vrsqrt.pop %v2066
        %v2070 = vmul.f32 %v2049, %v2067
        %v2071 = vmul.f32 %v2050, %v2068
        %v2072 = vmul.f32 %v2051, %v2069
        %v2073 = vld [vmem:[%s9] sm:$0x1]
        %v2075 = vlaneseq
        %v2076 = vshrl.u32 %v2075, 7
        %v2077 = vsub.s32 0, %v2076
        %v2078 = vrot.slane %v2073, %v2077
        %v2080 = vmul.f32 %v2070, %v2078
        %v2081 = vmul.f32 %v2071, %v2078
        %v2082 = vmul.f32 %v2072, %v2078
        %v2083 = vld [vmem:[%s10] sm:$0x1]
        %v2085 = vlaneseq
        %v2086 = vshrl.u32 %v2085, 7
        %v2087 = vsub.s32 0, %v2086
        %v2088 = vrot.slane %v2083, %v2087
        %v2090 = vadd.f32 %v2080, %v2088
        %v2091 = vadd.f32 %v2081, %v2088
        %v2092 = vadd.f32 %v2082, %v2088
        %2093 = vst [vmem:[%s504] sm:$0xff] %v2090
        %2094 = vst [vmem:[%s504 + $0x8] sm:$0xff] %v2091
        %2095 = vst [vmem:[%s504 + $0x10] sm:$0xff] %v2092
        %s2096 = sand.u32 %s284, 1
        %s2097 = scalar_lea.sflag [#allocation5], %s2096
        %s2098 = sand.u32 %s284, 1
        %s2099 = smul.addr %s2098, 24
        %s2100 = scalar_lea.vmem [#allocation14], %s2099
        // Predicated region
        $region89: #{tpu_custom_call.1} parent=63 // pred_check
          %p2101 = pneg %p294
        $region90: #{tpu_custom_call.1} parent=63 // pred_check_branch
          %2103 = sbr.rel (%p2101) target = $region92
        $region91: #{tpu_custom_call.1} parent=63 // pred_region
          %s2105 = ssub.s32 384, 384
          %2106 = vsyncadd %s2097, %s2105
          %s2107 = smul.addr %s35, 3
          %s2108 = smul.addr %s2107, 128
          %s2109 = scalar_lea.hbm %s11, %s2108
          %s2110 = sshll.u32 %s2100, 4
          %s2111 = int_to_ptr.vmem [resolvable:$true] %s2110
          %2116 = dma.vmem_to_hbm [thread:$0]  %s2111, 384, %s2109, %s2097, 128, 128, 8
        $region92: #{tpu_custom_call.1} parent=63 // pred_fallthru
          _
      $region64: #{tpu_custom_call.1} parent=5 // pred_fallthru
        _
      %p2117 = scmp.le.s32.totalorder 2, %s30
      // Predicated region
      $region93: #{tpu_custom_call.1} parent=5 // pred_check
        %p2118 = pneg %p2117
      $region94: #{tpu_custom_call.1} parent=5 // pred_check_branch
        %2120 = sbr.rel (%p2118) target = $region96
      $region95: #{tpu_custom_call.1} parent=5 // pred_region
        %s2121 = ssub.s32 %s30, 2
        // Predicated region
        $region97: #{tpu_custom_call.1} parent=95 // pred_check
          %p2122 = pneg %p300
        $region98: #{tpu_custom_call.1} parent=95 // pred_check_branch
          %2124 = sbr.rel (%p2122) target = $region100
        $region99: #{tpu_custom_call.1} parent=95 // pred_region
          %s2125 = sand.u32 %s285, 1
          %s2126 = scalar_lea.sflag [#allocation5], %s2125
          %s2127 = sand.u32 %s285, 1
          %s2128 = smul.addr %s2127, 24
          %s2129 = scalar_lea.vmem [#allocation14], %s2128
          %2130 = dma.done %s2126, 384
        $region100: #{tpu_custom_call.1} parent=95 // pred_fallthru
          _
      $region96: #{tpu_custom_call.1} parent=5 // pred_fallthru
        _
    $region6: #{tpu_custom_call.1} parent=1 // loop_footer
      %s34 = sadd.s32 1, %s30
    $region7: #{tpu_custom_call.1} parent=1 // loop_footer_branch
      %29 = sbr.rel target = $region3
    $region8: #{tpu_custom_call.1} parent=1 // loop_exit
      _
    %2131 = vsyncpa [#allocation4], 1
    %s2132 = scalar_lea.sflag [#allocation4], 1
    %2133 = vsyncpa %s2132, 1
    %2134 = vsyncpa [#allocation7], 1
    %s2135 = scalar_lea.sflag [#allocation7], 1
    %2136 = vsyncpa %s2135, 1
    %2137 = vsyncpa [#allocation10], 1
    %2138 = vsyncpa [#allocation13], 1
    %2139 = vsyncpa [#allocation5], 1
    %s2140 = scalar_lea.sflag [#allocation5], 1
    %2141 = vsyncpa %s2140, 1

</llo_original>
